<compile_context>
chip_gen: v7x
topology: tpu7x:2x2x1
jax: 0.10.0
libtpu: 0.0.40
codegen_flags: <defaults>
</compile_context>

<pallas_src>
import jax
import jax.numpy as jnp
from jax import lax
from jax.experimental import pallas as pl
from jax.experimental.pallas import tpu as pltpu

EPS = 1e-5


# ------------------------------ kernel --------------------------------------
def _make_kernel(N, Ho, Wo, Ce, Cout, s, has_proj):
    """Ce = s*s*Cin (space-to-depth channel width)."""
    R = N * Ho * Wo
    Ke = 2 // s + 1          # effective tap extent over the space-to-depth input
    dh0 = 1 // s             # center-tap offset (shortcut read)

    def bn_train(x, gamma, beta):
        # PyTorch BatchNorm2d training-mode forward: biased batch stats over rows.
        mean = jnp.mean(x, axis=0, keepdims=True)
        var = jnp.mean(jnp.square(x - mean), axis=0, keepdims=True)
        return (x - mean) * lax.rsqrt(var + EPS) * gamma + beta

    def kernel(y_ref, w1_ref, g1_ref, b1_ref, w2_ref, g2_ref, b2_ref, *rest):
        if has_proj:
            ws_ref, gs_ref, bs_ref, o_ref, pad_ref = rest
        else:
            o_ref, pad_ref = rest

        # Input arrives bf16 (halved DMA); do layout ops in f32, MXU ops in bf16.
        yv = y_ref[...].astype(jnp.float32)

        # ---- conv1: one fused K = Ke*Ke*Ce contraction on the MXU -----------
        taps1 = [yv[:, dh:dh + Ho, dw:dw + Wo, :].reshape(R, Ce)
                 for dh in range(Ke) for dw in range(Ke)]
        patch1 = taps1[0] if len(taps1) == 1 else jnp.concatenate(taps1, axis=-1)
        acc1 = jnp.dot(patch1.astype(jnp.bfloat16), w1_ref[...],
                       preferred_element_type=jnp.float32)
        out1 = jnp.maximum(bn_train(acc1, g1_ref[...], b1_ref[...]), 0.0)

        # ---- spatially pad out1 (padding=1) into VMEM scratch; halo only ----
        pad_ref[:, 0:1, :, :] = jnp.zeros((N, 1, Wo + 2, Cout), jnp.float32)
        pad_ref[:, Ho + 1:Ho + 2, :, :] = jnp.zeros((N, 1, Wo + 2, Cout), jnp.float32)
        pad_ref[:, 1:Ho + 1, 0:1, :] = jnp.zeros((N, Ho, 1, Cout), jnp.float32)
        pad_ref[:, 1:Ho + 1, Wo + 1:Wo + 2, :] = jnp.zeros((N, Ho, 1, Cout), jnp.float32)
        pad_ref[:, 1:Ho + 1, 1:Wo + 1, :] = out1.reshape(N, Ho, Wo, Cout)

        # ---- conv2 (3x3, stride 1): one fused K = 9*Cout contraction --------
        taps2 = [pad_ref[:, kh:kh + Ho, kw:kw + Wo, :].reshape(R, Cout)
                 for kh in range(3) for kw in range(3)]
        patch2 = jnp.concatenate(taps2, axis=-1)
        acc2 = jnp.dot(patch2.astype(jnp.bfloat16), w2_ref[...],
                       preferred_element_type=jnp.float32)
        out2 = bn_train(acc2, g2_ref[...], b2_ref[...])

        # ---- shortcut: stride-aligned center tap of the resident input ------
        xc = yv[:, dh0:dh0 + Ho, dh0:dh0 + Wo, :].reshape(R, Ce)
        if has_proj:
            sc = jnp.dot(xc.astype(jnp.bfloat16), ws_ref[...],
                         preferred_element_type=jnp.float32)
            sc = bn_train(sc, gs_ref[...], bs_ref[...])
        else:
            sc = xc                      # identity: s == 1 and Ce == Cin == Cout

        o_ref[...] = jnp.maximum(out2 + sc, 0.0)

    return kernel


# ------------------------- wrapper-side weight plumbing ----------------------
def _s2d_conv3x3_weight(w, s):
    """(3,3,Cin,Cout) HWIO -> (Ke*Ke*s*s*Cin, Cout) matching the space-to-depth
    input layout; taps ordered (dh, dw), channels ordered (p, q, cin)."""
    Cin, Cout = w.shape[2], w.shape[3]
    Ke = 2 // s + 1
    wt = jnp.zeros((Ke, Ke, s, s, Cin, Cout), w.dtype)
    for kh in range(3):
        for kw in range(3):
            dh, p = divmod(kh, s)
            dw, q = divmod(kw, s)
            wt = wt.at[dh, dw, p, q, :, :].set(w[kh, kw])
    return wt.reshape(Ke * Ke * s * s * Cin, Cout)


def _s2d_shortcut_weight(ws, s):
    """(Cin,Cout) 1x1-conv weight -> (s*s*Cin, Cout): only phase (1%s, 1%s)
    (the stride-aligned sample of the unpadded input) is non-zero."""
    Cin, Cout = ws.shape
    p0 = 1 % s
    wt = jnp.zeros((s, s, Cin, Cout), ws.dtype)
    wt = wt.at[p0, p0, :, :].set(ws)
    return wt.reshape(s * s * Cin, Cout)


def basic_block_pallas(x_nchw, params, stride):
    """Forward pass of BasicBlock. Input/output are NCHW float32."""
    N, Cin, H, W = x_nchw.shape
    Cout = params['w1'].shape[-1]
    s = int(stride)
    has_proj = (s != 1) or (Cin != Cout)
    Ho = (H - 1) // s + 1
    Wo = (W - 1) // s + 1
    R = N * Ho * Wo
    Ce = s * s * Cin
    f32 = jnp.float32

    # NHWC, bf16 activations for DMA/MXU (BN statistics stay f32 in-kernel).
    x = jnp.transpose(x_nchw, (0, 2, 3, 1)).astype(jnp.bfloat16)
    # conv padding=1, rounded up so (H+2, W+2) are multiples of s, then
    # space-to-depth by s -> every in-kernel tap is a contiguous slice and the
    # activation is DMA'd exactly once (no 9x im2col duplication).
    Ha = -(-(H + 2) // s)
    Wa = -(-(W + 2) // s)
    xp = jnp.pad(x, ((0, 0), (1, Ha * s - H - 1), (1, Wa * s - W - 1), (0, 0)))
    y = (xp.reshape(N, Ha, s, Wa, s, Cin)
           .transpose(0, 1, 3, 2, 4, 5)
           .reshape(N, Ha, Wa, Ce))

    w1 = _s2d_conv3x3_weight(params['w1'].astype(f32), s).astype(jnp.bfloat16)
    w2 = params['w2'].astype(f32).reshape(9 * Cout, Cout).astype(jnp.bfloat16)
    g1 = params['g1'].reshape(1, Cout).astype(f32)
    b1 = params['b1'].reshape(1, Cout).astype(f32)
    g2 = params['g2'].reshape(1, Cout).astype(f32)
    b2 = params['b2'].reshape(1, Cout).astype(f32)

    inputs = [y, w1, g1, b1, w2, g2, b2]
    if has_proj:
        ws = _s2d_shortcut_weight(params['ws'].astype(f32), s).astype(jnp.bfloat16)
        gs = params['gs'].reshape(1, Cout).astype(f32)
        bs = params['bs'].reshape(1, Cout).astype(f32)
        inputs += [ws, gs, bs]

    def full_spec(shape):
        n = len(shape)
        return pl.BlockSpec(shape, lambda i, n=n: (0,) * n)

    kernel = _make_kernel(N, Ho, Wo, Ce, Cout, s, has_proj)

    out_flat = pl.pallas_call(
        kernel,
        out_shape=jax.ShapeDtypeStruct((R, Cout), f32),
        grid=(1,),
        in_specs=[full_spec(a.shape) for a in inputs],
        out_specs=full_spec((R, Cout)),
        scratch_shapes=[pltpu.VMEM((N, Ho + 2, Wo + 2, Cout), f32)],
        compiler_params=pltpu.CompilerParams(
            dimension_semantics=("arbitrary",)),
    )(*inputs)

    out_nhwc = out_flat.reshape(N, Ho, Wo, Cout)
    return jnp.transpose(out_nhwc, (0, 3, 1, 2))                      # NCHW


# ------------------------------ pure-JAX reference ---------------------------
def _bn_ref(y, g, b):
    m = jnp.mean(y, axis=(0, 1, 2), keepdims=True)
    v = jnp.mean(jnp.square(y - m), axis=(0, 1, 2), keepdims=True)
    return (y - m) / jnp.sqrt(v + EPS) * g.reshape(1, 1, 1, -1) + b.reshape(1, 1, 1, -1)


def basic_block_reference(x_nchw, params, stride):
    x = jnp.transpose(x_nchw, (0, 2, 3, 1)).astype(jnp.float32)       # NHWC
    Cin = x.shape[-1]
    Cout = params['w1'].shape[-1]
    has_proj = (stride != 1) or (Cin != Cout)
    dn = ('NHWC', 'HWIO', 'NHWC')

    out = lax.conv_general_dilated(x, params['w1'], (stride, stride),
                                   [(1, 1), (1, 1)], dimension_numbers=dn)
    out = jax.nn.relu(_bn_ref(out, params['g1'], params['b1']))
    out = lax.conv_general_dilated(out, params['w2'], (1, 1),
                                   [(1, 1), (1, 1)], dimension_numbers=dn)
    out = _bn_ref(out, params['g2'], params['b2'])

    if has_proj:
        sc = lax.conv_general_dilated(x, params['ws'].reshape(1, 1, Cin, Cout),
                                      (stride, stride), [(0, 0), (0, 0)],
                                      dimension_numbers=dn)
        sc = _bn_ref(sc, params['gs'], params['bs'])
    else:
        sc = x
    out = jax.nn.relu(out + sc)
    return jnp.transpose(out, (0, 3, 1, 2))


# ------------------------------ deterministic params -------------------------
def init_params(key, in_planes, planes):
    ks = jax.random.split(key, 10)
    f32 = jnp.float32
    return {
        'w1': 0.1 * jax.random.normal(ks[0], (3, 3, in_planes, planes), f32),
        'g1': 1.0 + 0.1 * jax.random.normal(ks[1], (planes,), f32),
        'b1': 0.1 * jax.random.normal(ks[2], (planes,), f32),
        'w2': 0.1 * jax.random.normal(ks[3], (3, 3, planes, planes), f32),
        'g2': 1.0 + 0.1 * jax.random.normal(ks[4], (planes,), f32),
        'b2': 0.1 * jax.random.normal(ks[5], (planes,), f32),
        'ws': 0.1 * jax.random.normal(ks[6], (in_planes, planes), f32),
        'gs': 1.0 + 0.1 * jax.random.normal(ks[7], (planes,), f32),
        'bs': 0.1 * jax.random.normal(ks[8], (planes,), f32),
    }


if __name__ == "__main__":
    key = jax.random.PRNGKey(0)
    # bf16 MXU operands (per perf review) -> compare against the f32 reference
    # with a correspondingly looser tolerance.
    ATOL = RTOL = 1e-1

    # Config A: projection shortcut (in_planes != planes, stride=2)
    kx, kp, key = jax.random.split(key, 3)
    x_a = jax.random.normal(kx, (2, 4, 16, 16), jnp.float32)          # NCHW
    params_a = init_params(kp, in_planes=4, planes=8)
    out_a = jax.block_until_ready(basic_block_pallas(x_a, params_a, stride=2))
    ref_a = basic_block_reference(x_a, params_a, stride=2)
    assert out_a.shape == (2, 8, 8, 8)
    assert jnp.allclose(out_a, ref_a, atol=ATOL, rtol=RTOL), "projection block mismatch"

    # Config B: identity shortcut (in_planes == planes, stride=1)
    kx, kp, key = jax.random.split(key, 3)
    x_b = jax.random.normal(kx, (2, 8, 16, 16), jnp.float32)          # NCHW
    params_b = init_params(kp, in_planes=8, planes=8)
    out_b = jax.block_until_ready(basic_block_pallas(x_b, params_b, stride=1))
    ref_b = basic_block_reference(x_b, params_b, stride=1)
    assert out_b.shape == (2, 8, 16, 16)
    assert jnp.allclose(out_b, ref_b, atol=ATOL, rtol=RTOL), "identity block mismatch"

    print("KERNEL_OK")
</pallas_src>

<mosaic_0001>
module attributes {stable_mosaic.version = 11 : i64} {
  func.func @kernel(%arg0: i32, %arg1: memref<2x9x9x16xbf16, #tpu.memory_space<vmem>>, %arg2: memref<64x8xbf16, #tpu.memory_space<vmem>>, %arg3: memref<1x8xf32, #tpu.memory_space<vmem>>, %arg4: memref<1x8xf32, #tpu.memory_space<vmem>>, %arg5: memref<72x8xbf16, #tpu.memory_space<vmem>>, %arg6: memref<1x8xf32, #tpu.memory_space<vmem>>, %arg7: memref<1x8xf32, #tpu.memory_space<vmem>>, %arg8: memref<16x8xbf16, #tpu.memory_space<vmem>>, %arg9: memref<1x8xf32, #tpu.memory_space<vmem>>, %arg10: memref<1x8xf32, #tpu.memory_space<vmem>>, %arg11: memref<128x8xf32, #tpu.memory_space<vmem>>, %arg12: memref<2x10x10x8xf32, #tpu.memory_space<vmem>>) attributes {dimension_semantics = [#tpu.dimension_semantics<arbitrary>], iteration_bounds = array<i64: 1>, scalar_prefetch = 0 : i64, scratch_operands = 1 : i64, tpu.core_type = #tpu.core_type<tc>, window_params = [{pipeline_mode = #tpu.pipeline_mode<synchronous>, transform_indices = @transform_0, window_bounds = array<i64: 2, 9, 9, 16>}, {pipeline_mode = #tpu.pipeline_mode<synchronous>, transform_indices = @transform_1, window_bounds = array<i64: 64, 8>}, {pipeline_mode = #tpu.pipeline_mode<synchronous>, transform_indices = @transform_2, window_bounds = array<i64: 1, 8>}, {pipeline_mode = #tpu.pipeline_mode<synchronous>, transform_indices = @transform_3, window_bounds = array<i64: 1, 8>}, {pipeline_mode = #tpu.pipeline_mode<synchronous>, transform_indices = @transform_4, window_bounds = array<i64: 72, 8>}, {pipeline_mode = #tpu.pipeline_mode<synchronous>, transform_indices = @transform_5, window_bounds = array<i64: 1, 8>}, {pipeline_mode = #tpu.pipeline_mode<synchronous>, transform_indices = @transform_6, window_bounds = array<i64: 1, 8>}, {pipeline_mode = #tpu.pipeline_mode<synchronous>, transform_indices = @transform_7, window_bounds = array<i64: 16, 8>}, {pipeline_mode = #tpu.pipeline_mode<synchronous>, transform_indices = @transform_8, window_bounds = array<i64: 1, 8>}, {pipeline_mode = #tpu.pipeline_mode<synchronous>, transform_indices = @transform_9, window_bounds = array<i64: 1, 8>}, {pipeline_mode = #tpu.pipeline_mode<synchronous>, transform_indices = @transform_10, window_bounds = array<i64: 128, 8>}]} {
    %c0 = arith.constant 0 : index
    %c0_0 = arith.constant 0 : index
    %c0_1 = arith.constant 0 : index
    %c0_2 = arith.constant 0 : index
    %0 = vector.load %arg1[%c0, %c0_0, %c0_1, %c0_2] : memref<2x9x9x16xbf16, #tpu.memory_space<vmem>>, vector<2x9x9x16xbf16>
    %1 = arith.extf %0 : vector<2x9x9x16xbf16> to vector<2x9x9x16xf32>
    %2 = vector.extract_strided_slice %1 {offsets = [0, 0, 0, 0], sizes = [2, 8, 8, 16], strides = [1, 1, 1, 1]} : vector<2x9x9x16xf32> to vector<2x8x8x16xf32>
    %3 = vector.shape_cast %2 : vector<2x8x8x16xf32> to vector<128x16xf32>
    %4 = vector.extract_strided_slice %1 {offsets = [0, 0, 1, 0], sizes = [2, 8, 8, 16], strides = [1, 1, 1, 1]} : vector<2x9x9x16xf32> to vector<2x8x8x16xf32>
    %5 = vector.shape_cast %4 : vector<2x8x8x16xf32> to vector<128x16xf32>
    %6 = vector.extract_strided_slice %1 {offsets = [0, 1, 0, 0], sizes = [2, 8, 8, 16], strides = [1, 1, 1, 1]} : vector<2x9x9x16xf32> to vector<2x8x8x16xf32>
    %7 = vector.shape_cast %6 : vector<2x8x8x16xf32> to vector<128x16xf32>
    %8 = vector.extract_strided_slice %1 {offsets = [0, 1, 1, 0], sizes = [2, 8, 8, 16], strides = [1, 1, 1, 1]} : vector<2x9x9x16xf32> to vector<2x8x8x16xf32>
    %9 = vector.shape_cast %8 : vector<2x8x8x16xf32> to vector<128x16xf32>
    %10 = tpu.concatenate %3, %5, %7, %9 in 1 : vector<128x16xf32>, vector<128x16xf32>, vector<128x16xf32>, vector<128x16xf32> -> vector<128x64xf32>
    %11 = arith.truncf %10 : vector<128x64xf32> to vector<128x64xbf16>
    %c0_3 = arith.constant 0 : index
    %c0_4 = arith.constant 0 : index
    %12 = vector.load %arg2[%c0_3, %c0_4] : memref<64x8xbf16, #tpu.memory_space<vmem>>, vector<64x8xbf16>
    %cst = arith.constant dense<0.000000e+00> : vector<128x8xf32>
    %13 = tpu.matmul %11, %12, %cst {dimension_numbers = #tpu.dot_dimension_numbers<[1], [0], [0], [1], [0, 0, 1, 1], [], []>} : vector<128x64xbf16>, vector<64x8xbf16>, vector<128x8xf32> -> vector<128x8xf32>
    %c0_5 = arith.constant 0 : index
    %c0_6 = arith.constant 0 : index
    %14 = vector.load %arg3[%c0_5, %c0_6] : memref<1x8xf32, #tpu.memory_space<vmem>>, vector<1x8xf32>
    %c0_7 = arith.constant 0 : index
    %c0_8 = arith.constant 0 : index
    %15 = vector.load %arg4[%c0_7, %c0_8] : memref<1x8xf32, #tpu.memory_space<vmem>>, vector<1x8xf32>
    %cst_9 = arith.constant dense<0.000000e+00> : vector<8xf32>
    %16 = vector.multi_reduction <add>, %13, %cst_9 [0] : vector<128x8xf32> to vector<8xf32>
    %17 = vector.shape_cast %16 : vector<8xf32> to vector<1x8xf32>
    %cst_10 = arith.constant 1.280000e+02 : f32
    %18 = vector.broadcast %cst_10 : f32 to vector<1x8xf32>
    %19 = arith.divf %17, %18 : vector<1x8xf32>
    %20 = vector.broadcast %19 : vector<1x8xf32> to vector<128x8xf32>
    %21 = arith.subf %13, %20 : vector<128x8xf32>
    %22 = arith.mulf %21, %21 : vector<128x8xf32>
    %cst_11 = arith.constant dense<0.000000e+00> : vector<8xf32>
    %23 = vector.multi_reduction <add>, %22, %cst_11 [0] : vector<128x8xf32> to vector<8xf32>
    %24 = vector.shape_cast %23 : vector<8xf32> to vector<1x8xf32>
    %cst_12 = arith.constant 1.280000e+02 : f32
    %25 = vector.broadcast %cst_12 : f32 to vector<1x8xf32>
    %26 = arith.divf %24, %25 : vector<1x8xf32>
    %27 = vector.broadcast %19 : vector<1x8xf32> to vector<128x8xf32>
    %28 = arith.subf %13, %27 : vector<128x8xf32>
    %cst_13 = arith.constant 9.99999974E-6 : f32
    %29 = vector.broadcast %cst_13 : f32 to vector<1x8xf32>
    %30 = arith.addf %26, %29 : vector<1x8xf32>
    %31 = math.rsqrt %30 : vector<1x8xf32>
    %32 = vector.broadcast %31 : vector<1x8xf32> to vector<128x8xf32>
    %33 = arith.mulf %28, %32 : vector<128x8xf32>
    %34 = vector.broadcast %14 : vector<1x8xf32> to vector<128x8xf32>
    %35 = arith.mulf %33, %34 : vector<128x8xf32>
    %36 = vector.broadcast %15 : vector<1x8xf32> to vector<128x8xf32>
    %37 = arith.addf %35, %36 : vector<128x8xf32>
    %cst_14 = arith.constant 0.000000e+00 : f32
    %38 = vector.broadcast %cst_14 : f32 to vector<128x8xf32>
    %39 = arith.maximumf %37, %38 : vector<128x8xf32>
    %cst_15 = arith.constant 0.000000e+00 : f32
    %40 = vector.broadcast %cst_15 : f32 to vector<2x1x10x8xf32>
    %c0_16 = arith.constant 0 : index
    %c0_17 = arith.constant 0 : index
    %c0_18 = arith.constant 0 : index
    %c0_19 = arith.constant 0 : index
    %41 = vector.load %arg12[%c0_16, %c0_17, %c0_18, %c0_19] : memref<2x10x10x8xf32, #tpu.memory_space<vmem>>, vector<2x1x10x8xf32>
    tpu.vector_store %arg12[%c0_16, %c0_17, %c0_18, %c0_19], %40 {strides = array<i32>} : memref<2x10x10x8xf32, #tpu.memory_space<vmem>>, vector<2x1x10x8xf32>,
    %cst_20 = arith.constant 0.000000e+00 : f32
    %42 = vector.broadcast %cst_20 : f32 to vector<2x1x10x8xf32>
    %c0_21 = arith.constant 0 : index
    %c9 = arith.constant 9 : index
    %c0_22 = arith.constant 0 : index
    %c0_23 = arith.constant 0 : index
    %43 = vector.load %arg12[%c0_21, %c9, %c0_22, %c0_23] : memref<2x10x10x8xf32, #tpu.memory_space<vmem>>, vector<2x1x10x8xf32>
    tpu.vector_store %arg12[%c0_21, %c9, %c0_22, %c0_23], %42 {strides = array<i32>} : memref<2x10x10x8xf32, #tpu.memory_space<vmem>>, vector<2x1x10x8xf32>,
    %cst_24 = arith.constant 0.000000e+00 : f32
    %44 = vector.broadcast %cst_24 : f32 to vector<2x8x1x8xf32>
    %c0_25 = arith.constant 0 : index
    %c1 = arith.constant 1 : index
    %c0_26 = arith.constant 0 : index
    %c0_27 = arith.constant 0 : index
    %45 = vector.load %arg12[%c0_25, %c1, %c0_26, %c0_27] : memref<2x10x10x8xf32, #tpu.memory_space<vmem>>, vector<2x8x1x8xf32>
    tpu.vector_store %arg12[%c0_25, %c1, %c0_26, %c0_27], %44 {strides = array<i32>} : memref<2x10x10x8xf32, #tpu.memory_space<vmem>>, vector<2x8x1x8xf32>,
    %cst_28 = arith.constant 0.000000e+00 : f32
    %46 = vector.broadcast %cst_28 : f32 to vector<2x8x1x8xf32>
    %c0_29 = arith.constant 0 : index
    %c1_30 = arith.constant 1 : index
    %c9_31 = arith.constant 9 : index
    %c0_32 = arith.constant 0 : index
    %47 = vector.load %arg12[%c0_29, %c1_30, %c9_31, %c0_32] : memref<2x10x10x8xf32, #tpu.memory_space<vmem>>, vector<2x8x1x8xf32>
    tpu.vector_store %arg12[%c0_29, %c1_30, %c9_31, %c0_32], %46 {strides = array<i32>} : memref<2x10x10x8xf32, #tpu.memory_space<vmem>>, vector<2x8x1x8xf32>,
    %48 = vector.shape_cast %39 : vector<128x8xf32> to vector<2x8x8x8xf32>
    %c0_33 = arith.constant 0 : index
    %c1_34 = arith.constant 1 : index
    %c1_35 = arith.constant 1 : index
    %c0_36 = arith.constant 0 : index
    %49 = vector.load %arg12[%c0_33, %c1_34, %c1_35, %c0_36] : memref<2x10x10x8xf32, #tpu.memory_space<vmem>>, vector<2x8x8x8xf32>
    tpu.vector_store %arg12[%c0_33, %c1_34, %c1_35, %c0_36], %48 {strides = array<i32>} : memref<2x10x10x8xf32, #tpu.memory_space<vmem>>, vector<2x8x8x8xf32>,
    %c0_37 = arith.constant 0 : index
    %c0_38 = arith.constant 0 : index
    %c0_39 = arith.constant 0 : index
    %c0_40 = arith.constant 0 : index
    %50 = vector.load %arg12[%c0_37, %c0_38, %c0_39, %c0_40] : memref<2x10x10x8xf32, #tpu.memory_space<vmem>>, vector<2x8x8x8xf32>
    %51 = vector.shape_cast %50 : vector<2x8x8x8xf32> to vector<128x8xf32>
    %c0_41 = arith.constant 0 : index
    %c0_42 = arith.constant 0 : index
    %c1_43 = arith.constant 1 : index
    %c0_44 = arith.constant 0 : index
    %52 = vector.load %arg12[%c0_41, %c0_42, %c1_43, %c0_44] : memref<2x10x10x8xf32, #tpu.memory_space<vmem>>, vector<2x8x8x8xf32>
    %53 = vector.shape_cast %52 : vector<2x8x8x8xf32> to vector<128x8xf32>
    %c0_45 = arith.constant 0 : index
    %c0_46 = arith.constant 0 : index
    %c2 = arith.constant 2 : index
    %c0_47 = arith.constant 0 : index
    %54 = vector.load %arg12[%c0_45, %c0_46, %c2, %c0_47] : memref<2x10x10x8xf32, #tpu.memory_space<vmem>>, vector<2x8x8x8xf32>
    %55 = vector.shape_cast %54 : vector<2x8x8x8xf32> to vector<128x8xf32>
    %c0_48 = arith.constant 0 : index
    %c1_49 = arith.constant 1 : index
    %c0_50 = arith.constant 0 : index
    %c0_51 = arith.constant 0 : index
    %56 = vector.load %arg12[%c0_48, %c1_49, %c0_50, %c0_51] : memref<2x10x10x8xf32, #tpu.memory_space<vmem>>, vector<2x8x8x8xf32>
    %57 = vector.shape_cast %56 : vector<2x8x8x8xf32> to vector<128x8xf32>
    %c0_52 = arith.constant 0 : index
    %c1_53 = arith.constant 1 : index
    %c1_54 = arith.constant 1 : index
    %c0_55 = arith.constant 0 : index
    %58 = vector.load %arg12[%c0_52, %c1_53, %c1_54, %c0_55] : memref<2x10x10x8xf32, #tpu.memory_space<vmem>>, vector<2x8x8x8xf32>
    %59 = vector.shape_cast %58 : vector<2x8x8x8xf32> to vector<128x8xf32>
    %c0_56 = arith.constant 0 : index
    %c1_57 = arith.constant 1 : index
    %c2_58 = arith.constant 2 : index
    %c0_59 = arith.constant 0 : index
    %60 = vector.load %arg12[%c0_56, %c1_57, %c2_58, %c0_59] : memref<2x10x10x8xf32, #tpu.memory_space<vmem>>, vector<2x8x8x8xf32>
    %61 = vector.shape_cast %60 : vector<2x8x8x8xf32> to vector<128x8xf32>
    %c0_60 = arith.constant 0 : index
    %c2_61 = arith.constant 2 : index
    %c0_62 = arith.constant 0 : index
    %c0_63 = arith.constant 0 : index
    %62 = vector.load %arg12[%c0_60, %c2_61, %c0_62, %c0_63] : memref<2x10x10x8xf32, #tpu.memory_space<vmem>>, vector<2x8x8x8xf32>
    %63 = vector.shape_cast %62 : vector<2x8x8x8xf32> to vector<128x8xf32>
    %c0_64 = arith.constant 0 : index
    %c2_65 = arith.constant 2 : index
    %c1_66 = arith.constant 1 : index
    %c0_67 = arith.constant 0 : index
    %64 = vector.load %arg12[%c0_64, %c2_65, %c1_66, %c0_67] : memref<2x10x10x8xf32, #tpu.memory_space<vmem>>, vector<2x8x8x8xf32>
    %65 = vector.shape_cast %64 : vector<2x8x8x8xf32> to vector<128x8xf32>
    %c0_68 = arith.constant 0 : index
    %c2_69 = arith.constant 2 : index
    %c2_70 = arith.constant 2 : index
    %c0_71 = arith.constant 0 : index
    %66 = vector.load %arg12[%c0_68, %c2_69, %c2_70, %c0_71] : memref<2x10x10x8xf32, #tpu.memory_space<vmem>>, vector<2x8x8x8xf32>
    %67 = vector.shape_cast %66 : vector<2x8x8x8xf32> to vector<128x8xf32>
    %68 = tpu.concatenate %51, %53, %55, %57, %59, %61, %63, %65, %67 in 1 : vector<128x8xf32>, vector<128x8xf32>, vector<128x8xf32>, vector<128x8xf32>, vector<128x8xf32>, vector<128x8xf32>, vector<128x8xf32>, vector<128x8xf32>, vector<128x8xf32> -> vector<128x72xf32>
    %69 = arith.truncf %68 : vector<128x72xf32> to vector<128x72xbf16>
    %c0_72 = arith.constant 0 : index
    %c0_73 = arith.constant 0 : index
    %70 = vector.load %arg5[%c0_72, %c0_73] : memref<72x8xbf16, #tpu.memory_space<vmem>>, vector<72x8xbf16>
    %cst_74 = arith.constant dense<0.000000e+00> : vector<128x8xf32>
    %71 = tpu.matmul %69, %70, %cst_74 {dimension_numbers = #tpu.dot_dimension_numbers<[1], [0], [0], [1], [0, 0, 1, 1], [], []>} : vector<128x72xbf16>, vector<72x8xbf16>, vector<128x8xf32> -> vector<128x8xf32>
    %c0_75 = arith.constant 0 : index
    %c0_76 = arith.constant 0 : index
    %72 = vector.load %arg6[%c0_75, %c0_76] : memref<1x8xf32, #tpu.memory_space<vmem>>, vector<1x8xf32>
    %c0_77 = arith.constant 0 : index
    %c0_78 = arith.constant 0 : index
    %73 = vector.load %arg7[%c0_77, %c0_78] : memref<1x8xf32, #tpu.memory_space<vmem>>, vector<1x8xf32>
    %cst_79 = arith.constant dense<0.000000e+00> : vector<8xf32>
    %74 = vector.multi_reduction <add>, %71, %cst_79 [0] : vector<128x8xf32> to vector<8xf32>
    %75 = vector.shape_cast %74 : vector<8xf32> to vector<1x8xf32>
    %cst_80 = arith.constant 1.280000e+02 : f32
    %76 = vector.broadcast %cst_80 : f32 to vector<1x8xf32>
    %77 = arith.divf %75, %76 : vector<1x8xf32>
    %78 = vector.broadcast %77 : vector<1x8xf32> to vector<128x8xf32>
    %79 = arith.subf %71, %78 : vector<128x8xf32>
    %80 = arith.mulf %79, %79 : vector<128x8xf32>
    %cst_81 = arith.constant dense<0.000000e+00> : vector<8xf32>
    %81 = vector.multi_reduction <add>, %80, %cst_81 [0] : vector<128x8xf32> to vector<8xf32>
    %82 = vector.shape_cast %81 : vector<8xf32> to vector<1x8xf32>
    %cst_82 = arith.constant 1.280000e+02 : f32
    %83 = vector.broadcast %cst_82 : f32 to vector<1x8xf32>
    %84 = arith.divf %82, %83 : vector<1x8xf32>
    %85 = vector.broadcast %77 : vector<1x8xf32> to vector<128x8xf32>
    %86 = arith.subf %71, %85 : vector<128x8xf32>
    %cst_83 = arith.constant 9.99999974E-6 : f32
    %87 = vector.broadcast %cst_83 : f32 to vector<1x8xf32>
    %88 = arith.addf %84, %87 : vector<1x8xf32>
    %89 = math.rsqrt %88 : vector<1x8xf32>
    %90 = vector.broadcast %89 : vector<1x8xf32> to vector<128x8xf32>
    %91 = arith.mulf %86, %90 : vector<128x8xf32>
    %92 = vector.broadcast %72 : vector<1x8xf32> to vector<128x8xf32>
    %93 = arith.mulf %91, %92 : vector<128x8xf32>
    %94 = vector.broadcast %73 : vector<1x8xf32> to vector<128x8xf32>
    %95 = arith.addf %93, %94 : vector<128x8xf32>
    %96 = vector.extract_strided_slice %1 {offsets = [0, 0, 0, 0], sizes = [2, 8, 8, 16], strides = [1, 1, 1, 1]} : vector<2x9x9x16xf32> to vector<2x8x8x16xf32>
    %97 = vector.shape_cast %96 : vector<2x8x8x16xf32> to vector<128x16xf32>
    %98 = arith.truncf %97 : vector<128x16xf32> to vector<128x16xbf16>
    %c0_84 = arith.constant 0 : index
    %c0_85 = arith.constant 0 : index
    %99 = vector.load %arg8[%c0_84, %c0_85] : memref<16x8xbf16, #tpu.memory_space<vmem>>, vector<16x8xbf16>
    %cst_86 = arith.constant dense<0.000000e+00> : vector<128x8xf32>
    %100 = tpu.matmul %98, %99, %cst_86 {dimension_numbers = #tpu.dot_dimension_numbers<[1], [0], [0], [1], [0, 0, 1, 1], [], []>} : vector<128x16xbf16>, vector<16x8xbf16>, vector<128x8xf32> -> vector<128x8xf32>
    %c0_87 = arith.constant 0 : index
    %c0_88 = arith.constant 0 : index
    %101 = vector.load %arg9[%c0_87, %c0_88] : memref<1x8xf32, #tpu.memory_space<vmem>>, vector<1x8xf32>
    %c0_89 = arith.constant 0 : index
    %c0_90 = arith.constant 0 : index
    %102 = vector.load %arg10[%c0_89, %c0_90] : memref<1x8xf32, #tpu.memory_space<vmem>>, vector<1x8xf32>
    %cst_91 = arith.constant dense<0.000000e+00> : vector<8xf32>
    %103 = vector.multi_reduction <add>, %100, %cst_91 [0] : vector<128x8xf32> to vector<8xf32>
    %104 = vector.shape_cast %103 : vector<8xf32> to vector<1x8xf32>
    %cst_92 = arith.constant 1.280000e+02 : f32
    %105 = vector.broadcast %cst_92 : f32 to vector<1x8xf32>
    %106 = arith.divf %104, %105 : vector<1x8xf32>
    %107 = vector.broadcast %106 : vector<1x8xf32> to vector<128x8xf32>
    %108 = arith.subf %100, %107 : vector<128x8xf32>
    %109 = arith.mulf %108, %108 : vector<128x8xf32>
    %cst_93 = arith.constant dense<0.000000e+00> : vector<8xf32>
    %110 = vector.multi_reduction <add>, %109, %cst_93 [0] : vector<128x8xf32> to vector<8xf32>
    %111 = vector.shape_cast %110 : vector<8xf32> to vector<1x8xf32>
    %cst_94 = arith.constant 1.280000e+02 : f32
    %112 = vector.broadcast %cst_94 : f32 to vector<1x8xf32>
    %113 = arith.divf %111, %112 : vector<1x8xf32>
    %114 = vector.broadcast %106 : vector<1x8xf32> to vector<128x8xf32>
    %115 = arith.subf %100, %114 : vector<128x8xf32>
    %cst_95 = arith.constant 9.99999974E-6 : f32
    %116 = vector.broadcast %cst_95 : f32 to vector<1x8xf32>
    %117 = arith.addf %113, %116 : vector<1x8xf32>
    %118 = math.rsqrt %117 : vector<1x8xf32>
    %119 = vector.broadcast %118 : vector<1x8xf32> to vector<128x8xf32>
    %120 = arith.mulf %115, %119 : vector<128x8xf32>
    %121 = vector.broadcast %101 : vector<1x8xf32> to vector<128x8xf32>
    %122 = arith.mulf %120, %121 : vector<128x8xf32>
    %123 = vector.broadcast %102 : vector<1x8xf32> to vector<128x8xf32>
    %124 = arith.addf %122, %123 : vector<128x8xf32>
    %125 = arith.addf %95, %124 : vector<128x8xf32>
    %cst_96 = arith.constant 0.000000e+00 : f32
    %126 = vector.broadcast %cst_96 : f32 to vector<128x8xf32>
    %127 = arith.maximumf %125, %126 : vector<128x8xf32>
    %c0_97 = arith.constant 0 : index
    %c0_98 = arith.constant 0 : index
    %128 = vector.load %arg11[%c0_97, %c0_98] : memref<128x8xf32, #tpu.memory_space<vmem>>, vector<128x8xf32>
    tpu.vector_store %arg11[%c0_97, %c0_98], %127 {strides = array<i32>} : memref<128x8xf32, #tpu.memory_space<vmem>>, vector<128x8xf32>,
    return
  }
  func.func @transform_0(%arg0: i32) -> (i32, i32, i32, i32) {
    %c0_i32 = arith.constant 0 : i32
    %c0_i32_0 = arith.constant 0 : i32
    %c0_i32_1 = arith.constant 0 : i32
    %c0_i32_2 = arith.constant 0 : i32
    %c0_i32_3 = arith.constant 0 : i32
    return %c0_i32, %c0_i32_0, %c0_i32_1, %c0_i32_2 : i32, i32, i32, i32
  }
  func.func @transform_1(%arg0: i32) -> (i32, i32) {
    %c0_i32 = arith.constant 0 : i32
    %c0_i32_0 = arith.constant 0 : i32
    %c0_i32_1 = arith.constant 0 : i32
    return %c0_i32, %c0_i32_0 : i32, i32
  }
  func.func @transform_2(%arg0: i32) -> (i32, i32) {
    %c0_i32 = arith.constant 0 : i32
    %c0_i32_0 = arith.constant 0 : i32
    %c0_i32_1 = arith.constant 0 : i32
    return %c0_i32, %c0_i32_0 : i32, i32
  }
  func.func @transform_3(%arg0: i32) -> (i32, i32) {
    %c0_i32 = arith.constant 0 : i32
    %c0_i32_0 = arith.constant 0 : i32
    %c0_i32_1 = arith.constant 0 : i32
    return %c0_i32, %c0_i32_0 : i32, i32
  }
  func.func @transform_4(%arg0: i32) -> (i32, i32) {
    %c0_i32 = arith.constant 0 : i32
    %c0_i32_0 = arith.constant 0 : i32
    %c0_i32_1 = arith.constant 0 : i32
    return %c0_i32, %c0_i32_0 : i32, i32
  }
  func.func @transform_5(%arg0: i32) -> (i32, i32) {
    %c0_i32 = arith.constant 0 : i32
    %c0_i32_0 = arith.constant 0 : i32
    %c0_i32_1 = arith.constant 0 : i32
    return %c0_i32, %c0_i32_0 : i32, i32
  }
  func.func @transform_6(%arg0: i32) -> (i32, i32) {
    %c0_i32 = arith.constant 0 : i32
    %c0_i32_0 = arith.constant 0 : i32
    %c0_i32_1 = arith.constant 0 : i32
    return %c0_i32, %c0_i32_0 : i32, i32
  }
  func.func @transform_7(%arg0: i32) -> (i32, i32) {
    %c0_i32 = arith.constant 0 : i32
    %c0_i32_0 = arith.constant 0 : i32
    %c0_i32_1 = arith.constant 0 : i32
    return %c0_i32, %c0_i32_0 : i32, i32
  }
  func.func @transform_8(%arg0: i32) -> (i32, i32) {
    %c0_i32 = arith.constant 0 : i32
    %c0_i32_0 = arith.constant 0 : i32
    %c0_i32_1 = arith.constant 0 : i32
    return %c0_i32, %c0_i32_0 : i32, i32
  }
  func.func @transform_9(%arg0: i32) -> (i32, i32) {
    %c0_i32 = arith.constant 0 : i32
    %c0_i32_0 = arith.constant 0 : i32
    %c0_i32_1 = arith.constant 0 : i32
    return %c0_i32, %c0_i32_0 : i32, i32
  }
  func.func @transform_10(%arg0: i32) -> (i32, i32) {
    %c0_i32 = arith.constant 0 : i32
    %c0_i32_0 = arith.constant 0 : i32
    %c0_i32_1 = arith.constant 0 : i32
    return %c0_i32, %c0_i32_0 : i32, i32
  }
}

</mosaic_0001>

<llo_original>
// kernel: tpu_custom_call.1
$region0: #{tpu_custom_call.1}
  #allocation0 [shape = 'u32[]', space=smem, size = 0x4, offset = 0x4, fixed_abs, tag = 'smem constant byte address 0x4 - core index']
  #allocation1 [shape = 'u32[144,128]{1,0:T(1,128)}', space=vmem, size = 0x12000, scoped, tag = 'internal scratch']
  #allocation2 [shape = 'f32[2,10,10,8]{3,2,1,0:T(8,128)}', space=vmem, size = 0x28000, scoped, tag = 'scratch operand']
  %s0 = inlined_call_operand.vmem [shape: bf16[2,9,9,16], index: 0, kind: input, shape index: {}]
  %s1 = inlined_call_operand.vmem [shape: bf16[64,8], index: 1, kind: input, shape index: {}]
  %s2 = inlined_call_operand.vmem [shape: f32[1,8], index: 2, kind: input, shape index: {}]
  %s3 = inlined_call_operand.vmem [shape: f32[1,8], index: 3, kind: input, shape index: {}]
  %s4 = inlined_call_operand.vmem [shape: bf16[72,8], index: 4, kind: input, shape index: {}]
  %s5 = inlined_call_operand.vmem [shape: f32[1,8], index: 5, kind: input, shape index: {}]
  %s6 = inlined_call_operand.vmem [shape: f32[1,8], index: 6, kind: input, shape index: {}]
  %s7 = inlined_call_operand.vmem [shape: bf16[16,8], index: 7, kind: input, shape index: {}]
  %s8 = inlined_call_operand.vmem [shape: f32[1,8], index: 8, kind: input, shape index: {}]
  %s9 = inlined_call_operand.vmem [shape: f32[1,8], index: 9, kind: input, shape index: {}]
  %s10 = inlined_call_operand.vmem [shape: f32[128,8], index: 10, kind: output, shape index: {}]
  %s11 = sld [smem:[#allocation0]]
  $region50: #{tpu_custom_call.1} parent=0
    _
  %s13 = ssub.s32 1, %s11
  %s14 = scalar_select 0, %s13, %s11
  // Predicated region
  $region2: #{tpu_custom_call.1} parent=0 // pred_check
    _
  $region3: #{tpu_custom_call.1} parent=0 // pred_check_branch
    %16 = sbr.rel (0) target = $region5
  $region4: #{tpu_custom_call.1} parent=0 // pred_region
    _
  $region5: #{tpu_custom_call.1} parent=0 // pred_fallthru
    _
  // Predicated region
  $region6: #{tpu_custom_call.1} parent=0 // pred_check
    _
  $region7: #{tpu_custom_call.1} parent=0 // pred_check_branch
    %18 = sbr.rel (0) target = $region9
  $region8: #{tpu_custom_call.1} parent=0 // pred_region
    _
  $region9: #{tpu_custom_call.1} parent=0 // pred_fallthru
    _
  // Predicated region
  $region10: #{tpu_custom_call.1} parent=0 // pred_check
    _
  $region11: #{tpu_custom_call.1} parent=0 // pred_check_branch
    %20 = sbr.rel (0) target = $region13
  $region12: #{tpu_custom_call.1} parent=0 // pred_region
    _
  $region13: #{tpu_custom_call.1} parent=0 // pred_fallthru
    _
  // Predicated region
  $region14: #{tpu_custom_call.1} parent=0 // pred_check
    _
  $region15: #{tpu_custom_call.1} parent=0 // pred_check_branch
    %22 = sbr.rel (0) target = $region17
  $region16: #{tpu_custom_call.1} parent=0 // pred_region
    _
  $region17: #{tpu_custom_call.1} parent=0 // pred_fallthru
    _
  // Predicated region
  $region18: #{tpu_custom_call.1} parent=0 // pred_check
    _
  $region19: #{tpu_custom_call.1} parent=0 // pred_check_branch
    %24 = sbr.rel (0) target = $region21
  $region20: #{tpu_custom_call.1} parent=0 // pred_region
    _
  $region21: #{tpu_custom_call.1} parent=0 // pred_fallthru
    _
  // Predicated region
  $region22: #{tpu_custom_call.1} parent=0 // pred_check
    _
  $region23: #{tpu_custom_call.1} parent=0 // pred_check_branch
    %26 = sbr.rel (0) target = $region25
  $region24: #{tpu_custom_call.1} parent=0 // pred_region
    _
  $region25: #{tpu_custom_call.1} parent=0 // pred_fallthru
    _
  // Predicated region
  $region26: #{tpu_custom_call.1} parent=0 // pred_check
    _
  $region27: #{tpu_custom_call.1} parent=0 // pred_check_branch
    %28 = sbr.rel (0) target = $region29
  $region28: #{tpu_custom_call.1} parent=0 // pred_region
    _
  $region29: #{tpu_custom_call.1} parent=0 // pred_fallthru
    _
  // Predicated region
  $region30: #{tpu_custom_call.1} parent=0 // pred_check
    _
  $region31: #{tpu_custom_call.1} parent=0 // pred_check_branch
    %30 = sbr.rel (0) target = $region33
  $region32: #{tpu_custom_call.1} parent=0 // pred_region
    _
  $region33: #{tpu_custom_call.1} parent=0 // pred_fallthru
    _
  // Predicated region
  $region34: #{tpu_custom_call.1} parent=0 // pred_check
    _
  $region35: #{tpu_custom_call.1} parent=0 // pred_check_branch
    %32 = sbr.rel (0) target = $region37
  $region36: #{tpu_custom_call.1} parent=0 // pred_region
    _
  $region37: #{tpu_custom_call.1} parent=0 // pred_fallthru
    _
  // Predicated region
  $region38: #{tpu_custom_call.1} parent=0 // pred_check
    _
  $region39: #{tpu_custom_call.1} parent=0 // pred_check_branch
    %34 = sbr.rel (0) target = $region41
  $region40: #{tpu_custom_call.1} parent=0 // pred_region
    _
  $region41: #{tpu_custom_call.1} parent=0 // pred_fallthru
    _
  %v36 = vld [vmem:[%s0] sm:$0xf]
  %v37 = vld [vmem:[%s0 + $0x4] sm:$0x1]
  %v38 = vld [vmem:[%s0 + $0x8] sm:$0xf]
  %v39 = vld [vmem:[%s0 + $0xc] sm:$0x1]
  %v40 = vld [vmem:[%s0 + $0x10] sm:$0xf]
  %v41 = vld [vmem:[%s0 + $0x14] sm:$0x1]
  %v42 = vld [vmem:[%s0 + $0x18] sm:$0xf]
  %v43 = vld [vmem:[%s0 + $0x1c] sm:$0x1]
  %v44 = vld [vmem:[%s0 + $0x20] sm:$0xf]
  %v45 = vld [vmem:[%s0 + $0x24] sm:$0x1]
  %v46 = vld [vmem:[%s0 + $0x28] sm:$0xf]
  %v47 = vld [vmem:[%s0 + $0x2c] sm:$0x1]
  %v48 = vld [vmem:[%s0 + $0x30] sm:$0xf]
  %v49 = vld [vmem:[%s0 + $0x34] sm:$0x1]
  %v50 = vld [vmem:[%s0 + $0x38] sm:$0xf]
  %v51 = vld [vmem:[%s0 + $0x3c] sm:$0x1]
  %v52 = vld [vmem:[%s0 + $0x40] sm:$0xf]
  %v53 = vld [vmem:[%s0 + $0x44] sm:$0x1]
  %v54 = vld [vmem:[%s0 + $0x48] sm:$0xf]
  %v55 = vld [vmem:[%s0 + $0x4c] sm:$0x1]
  %v56 = vld [vmem:[%s0 + $0x50] sm:$0xf]
  %v57 = vld [vmem:[%s0 + $0x54] sm:$0x1]
  %v58 = vld [vmem:[%s0 + $0x58] sm:$0xf]
  %v59 = vld [vmem:[%s0 + $0x5c] sm:$0x1]
  %v60 = vld [vmem:[%s0 + $0x60] sm:$0xf]
  %v61 = vld [vmem:[%s0 + $0x64] sm:$0x1]
  %v62 = vld [vmem:[%s0 + $0x68] sm:$0xf]
  %v63 = vld [vmem:[%s0 + $0x6c] sm:$0x1]
  %v64 = vld [vmem:[%s0 + $0x70] sm:$0xf]
  %v65 = vld [vmem:[%s0 + $0x74] sm:$0x1]
  %v66 = vld [vmem:[%s0 + $0x78] sm:$0xf]
  %v67 = vld [vmem:[%s0 + $0x7c] sm:$0x1]
  %v68 = vld [vmem:[%s0 + $0x80] sm:$0xf]
  %v69 = vld [vmem:[%s0 + $0x84] sm:$0x1]
  %v70 = vld [vmem:[%s0 + $0x88] sm:$0xf]
  %v71 = vld [vmem:[%s0 + $0x8c] sm:$0x1]
  %v72 = vunpack.c.l.bf16 %v36
  %v73 = vunpack.c.l.bf16 %v37
  %v74 = vunpack.c.l.bf16 %v38
  %v75 = vunpack.c.l.bf16 %v39
  %v76 = vunpack.c.l.bf16 %v40
  %v77 = vunpack.c.l.bf16 %v41
  %v78 = vunpack.c.l.bf16 %v42
  %v79 = vunpack.c.l.bf16 %v43
  %v80 = vunpack.c.l.bf16 %v44
  %v81 = vunpack.c.l.bf16 %v45
  %v82 = vunpack.c.l.bf16 %v46
  %v83 = vunpack.c.l.bf16 %v47
  %v84 = vunpack.c.l.bf16 %v48
  %v85 = vunpack.c.l.bf16 %v49
  %v86 = vunpack.c.l.bf16 %v50
  %v87 = vunpack.c.l.bf16 %v51
  %v88 = vunpack.c.l.bf16 %v52
  %v89 = vunpack.c.l.bf16 %v53
  %v90 = vunpack.c.l.bf16 %v54
  %v91 = vunpack.c.l.bf16 %v55
  %v92 = vunpack.c.l.bf16 %v56
  %v93 = vunpack.c.l.bf16 %v57
  %v94 = vunpack.c.l.bf16 %v58
  %v95 = vunpack.c.l.bf16 %v59
  %v96 = vunpack.c.l.bf16 %v60
  %v97 = vunpack.c.l.bf16 %v61
  %v98 = vunpack.c.l.bf16 %v62
  %v99 = vunpack.c.l.bf16 %v63
  %v100 = vunpack.c.l.bf16 %v64
  %v101 = vunpack.c.l.bf16 %v65
  %v102 = vunpack.c.l.bf16 %v66
  %v103 = vunpack.c.l.bf16 %v67
  %v104 = vunpack.c.l.bf16 %v68
  %v105 = vunpack.c.l.bf16 %v69
  %v106 = vunpack.c.l.bf16 %v70
  %v107 = vunpack.c.l.bf16 %v71
  %vm140 = vcmask 1046528
  %v141 = vrot.slane %v72, 1
  %v142 = vrot.slane %v73, 1
  %v143 = vsel %vm140, %v141, %v142
  %v144 = vrot.slane %v74, 1
  %v145 = vrot.slane %v75, 1
  %v146 = vsel %vm140, %v144, %v145
  %v147 = vrot.slane %v76, 1
  %v148 = vrot.slane %v77, 1
  %v149 = vsel %vm140, %v147, %v148
  %v150 = vrot.slane %v78, 1
  %v151 = vrot.slane %v79, 1
  %v152 = vsel %vm140, %v150, %v151
  %v153 = vrot.slane %v80, 1
  %v154 = vrot.slane %v81, 1
  %v155 = vsel %vm140, %v153, %v154
  %v156 = vrot.slane %v82, 1
  %v157 = vrot.slane %v83, 1
  %v158 = vsel %vm140, %v156, %v157
  %v159 = vrot.slane %v84, 1
  %v160 = vrot.slane %v85, 1
  %v161 = vsel %vm140, %v159, %v160
  %v162 = vrot.slane %v86, 1
  %v163 = vrot.slane %v87, 1
  %v164 = vsel %vm140, %v162, %v163
  %v165 = vrot.slane %v90, 1
  %v166 = vrot.slane %v91, 1
  %v167 = vsel %vm140, %v165, %v166
  %v168 = vrot.slane %v92, 1
  %v169 = vrot.slane %v93, 1
  %v170 = vsel %vm140, %v168, %v169
  %v171 = vrot.slane %v94, 1
  %v172 = vrot.slane %v95, 1
  %v173 = vsel %vm140, %v171, %v172
  %v174 = vrot.slane %v96, 1
  %v175 = vrot.slane %v97, 1
  %v176 = vsel %vm140, %v174, %v175
  %v177 = vrot.slane %v98, 1
  %v178 = vrot.slane %v99, 1
  %v179 = vsel %vm140, %v177, %v178
  %v180 = vrot.slane %v100, 1
  %v181 = vrot.slane %v101, 1
  %v182 = vsel %vm140, %v180, %v181
  %v183 = vrot.slane %v102, 1
  %v184 = vrot.slane %v103, 1
  %v185 = vsel %vm140, %v183, %v184
  %v186 = vrot.slane %v104, 1
  %v187 = vrot.slane %v105, 1
  %v188 = vsel %vm140, %v186, %v187
  %v193 = vrot.slane %v88, 1
  %v194 = vrot.slane %v89, 1
  %v195 = vsel %vm140, %v193, %v194
  %v196 = vrot.slane %v106, 1
  %v197 = vrot.slane %v107, 1
  %v198 = vsel %vm140, %v196, %v197
  %199 = vrot.lane.b32.xlu0 %v143, 16
  %v200 = vpop.permute.xlu0 %199
  %201 = vrot.lane.b32.xlu0 %v146, 16
  %v202 = vpop.permute.xlu0 %201
  %203 = vrot.lane.b32.xlu0 %v149, 16
  %v204 = vpop.permute.xlu0 %203
  %205 = vrot.lane.b32.xlu0 %v152, 16
  %v206 = vpop.permute.xlu0 %205
  %207 = vrot.lane.b32.xlu0 %v155, 16
  %v208 = vpop.permute.xlu0 %207
  %209 = vrot.lane.b32.xlu0 %v158, 16
  %v210 = vpop.permute.xlu0 %209
  %211 = vrot.lane.b32.xlu0 %v161, 16
  %v212 = vpop.permute.xlu0 %211
  %213 = vrot.lane.b32.xlu0 %v164, 16
  %v214 = vpop.permute.xlu0 %213
  %215 = vrot.lane.b32.xlu0 %v167, 16
  %v216 = vpop.permute.xlu0 %215
  %217 = vrot.lane.b32.xlu0 %v170, 16
  %v218 = vpop.permute.xlu0 %217
  %219 = vrot.lane.b32.xlu0 %v173, 16
  %v220 = vpop.permute.xlu0 %219
  %221 = vrot.lane.b32.xlu0 %v176, 16
  %v222 = vpop.permute.xlu0 %221
  %223 = vrot.lane.b32.xlu0 %v179, 16
  %v224 = vpop.permute.xlu0 %223
  %225 = vrot.lane.b32.xlu0 %v182, 16
  %v226 = vpop.permute.xlu0 %225
  %227 = vrot.lane.b32.xlu0 %v185, 16
  %v228 = vpop.permute.xlu0 %227
  %229 = vrot.lane.b32.xlu0 %v188, 16
  %v230 = vpop.permute.xlu0 %229
  %247 = vrot.lane.b32.xlu0 %v74, 32
  %v248 = vpop.permute.xlu0 %247
  %249 = vrot.lane.b32.xlu0 %v76, 32
  %v250 = vpop.permute.xlu0 %249
  %251 = vrot.lane.b32.xlu0 %v78, 32
  %v252 = vpop.permute.xlu0 %251
  %253 = vrot.lane.b32.xlu0 %v80, 32
  %v254 = vpop.permute.xlu0 %253
  %255 = vrot.lane.b32.xlu0 %v82, 32
  %v256 = vpop.permute.xlu0 %255
  %257 = vrot.lane.b32.xlu0 %v84, 32
  %v258 = vpop.permute.xlu0 %257
  %259 = vrot.lane.b32.xlu0 %v86, 32
  %v260 = vpop.permute.xlu0 %259
  %261 = vrot.lane.b32.xlu0 %v88, 32
  %v262 = vpop.permute.xlu0 %261
  %263 = vrot.lane.b32.xlu0 %v92, 32
  %v264 = vpop.permute.xlu0 %263
  %265 = vrot.lane.b32.xlu0 %v94, 32
  %v266 = vpop.permute.xlu0 %265
  %267 = vrot.lane.b32.xlu0 %v96, 32
  %v268 = vpop.permute.xlu0 %267
  %269 = vrot.lane.b32.xlu0 %v98, 32
  %v270 = vpop.permute.xlu0 %269
  %271 = vrot.lane.b32.xlu0 %v100, 32
  %v272 = vpop.permute.xlu0 %271
  %273 = vrot.lane.b32.xlu0 %v102, 32
  %v274 = vpop.permute.xlu0 %273
  %275 = vrot.lane.b32.xlu0 %v104, 32
  %v276 = vpop.permute.xlu0 %275
  %277 = vrot.lane.b32.xlu0 %v106, 32
  %v278 = vpop.permute.xlu0 %277
  %295 = vrot.lane.b32.xlu0 %v146, 48
  %v296 = vpop.permute.xlu0 %295
  %297 = vrot.lane.b32.xlu0 %v149, 48
  %v298 = vpop.permute.xlu0 %297
  %299 = vrot.lane.b32.xlu0 %v152, 48
  %v300 = vpop.permute.xlu0 %299
  %301 = vrot.lane.b32.xlu0 %v155, 48
  %v302 = vpop.permute.xlu0 %301
  %303 = vrot.lane.b32.xlu0 %v158, 48
  %v304 = vpop.permute.xlu0 %303
  %305 = vrot.lane.b32.xlu0 %v161, 48
  %v306 = vpop.permute.xlu0 %305
  %307 = vrot.lane.b32.xlu0 %v164, 48
  %v308 = vpop.permute.xlu0 %307
  %309 = vrot.lane.b32.xlu0 %v195, 48
  %v310 = vpop.permute.xlu0 %309
  %311 = vrot.lane.b32.xlu0 %v170, 48
  %v312 = vpop.permute.xlu0 %311
  %313 = vrot.lane.b32.xlu0 %v173, 48
  %v314 = vpop.permute.xlu0 %313
  %315 = vrot.lane.b32.xlu0 %v176, 48
  %v316 = vpop.permute.xlu0 %315
  %317 = vrot.lane.b32.xlu0 %v179, 48
  %v318 = vpop.permute.xlu0 %317
  %319 = vrot.lane.b32.xlu0 %v182, 48
  %v320 = vpop.permute.xlu0 %319
  %321 = vrot.lane.b32.xlu0 %v185, 48
  %v322 = vpop.permute.xlu0 %321
  %323 = vrot.lane.b32.xlu0 %v188, 48
  %v324 = vpop.permute.xlu0 %323
  %325 = vrot.lane.b32.xlu0 %v198, 48
  %v326 = vpop.permute.xlu0 %325
  %vm343 = vcmask 130048
  %v344 = vsel %vm343, %v72, %v200
  %v345 = vsel %vm343, %v74, %v202
  %v346 = vsel %vm343, %v76, %v204
  %v347 = vsel %vm343, %v78, %v206
  %v348 = vsel %vm343, %v80, %v208
  %v349 = vsel %vm343, %v82, %v210
  %v350 = vsel %vm343, %v84, %v212
  %v351 = vsel %vm343, %v86, %v214
  %v352 = vsel %vm343, %v90, %v216
  %v353 = vsel %vm343, %v92, %v218
  %v354 = vsel %vm343, %v94, %v220
  %v355 = vsel %vm343, %v96, %v222
  %v356 = vsel %vm343, %v98, %v224
  %v357 = vsel %vm343, %v100, %v226
  %v358 = vsel %vm343, %v102, %v228
  %v359 = vsel %vm343, %v104, %v230
  %vm360 = vcmask 261120
  %v361 = vsel %vm360, %v344, %v248
  %v362 = vsel %vm360, %v345, %v250
  %v363 = vsel %vm360, %v346, %v252
  %v364 = vsel %vm360, %v347, %v254
  %v365 = vsel %vm360, %v348, %v256
  %v366 = vsel %vm360, %v349, %v258
  %v367 = vsel %vm360, %v350, %v260
  %v368 = vsel %vm360, %v351, %v262
  %v369 = vsel %vm360, %v352, %v264
  %v370 = vsel %vm360, %v353, %v266
  %v371 = vsel %vm360, %v354, %v268
  %v372 = vsel %vm360, %v355, %v270
  %v373 = vsel %vm360, %v356, %v272
  %v374 = vsel %vm360, %v357, %v274
  %v375 = vsel %vm360, %v358, %v276
  %v376 = vsel %vm360, %v359, %v278
  %vm377 = vcmask 392192
  %v378 = vsel %vm377, %v361, %v296
  %v379 = vsel %vm377, %v362, %v298
  %v380 = vsel %vm377, %v363, %v300
  %v381 = vsel %vm377, %v364, %v302
  %v382 = vsel %vm377, %v365, %v304
  %v383 = vsel %vm377, %v366, %v306
  %v384 = vsel %vm377, %v367, %v308
  %v385 = vsel %vm377, %v368, %v310
  %v386 = vsel %vm377, %v369, %v312
  %v387 = vsel %vm377, %v370, %v314
  %v388 = vsel %vm377, %v371, %v316
  %v389 = vsel %vm377, %v372, %v318
  %v390 = vsel %vm377, %v373, %v320
  %v391 = vsel %vm377, %v374, %v322
  %v392 = vsel %vm377, %v375, %v324
  %v393 = vsel %vm377, %v376, %v326
  %v394 = vpack.c.bf16 %v379, %v378
  %v395 = vpack.c.bf16 %v381, %v380
  %v396 = vpack.c.bf16 %v383, %v382
  %v397 = vpack.c.bf16 %v385, %v384
  %v398 = vpack.c.bf16 %v387, %v386
  %v399 = vpack.c.bf16 %v389, %v388
  %v400 = vpack.c.bf16 %v391, %v390
  %v401 = vpack.c.bf16 %v393, %v392
  %v402 = vld [vmem:[%s1] sm:$0xf]
  %v403 = vld [vmem:[%s1 + $0x4] sm:$0xf]
  %v404 = vld [vmem:[%s1 + $0x8] sm:$0xf]
  %v405 = vld [vmem:[%s1 + $0xc] sm:$0xf]
  %v406 = vld [vmem:[%s1 + $0x10] sm:$0xf]
  %v407 = vld [vmem:[%s1 + $0x14] sm:$0xf]
  %v408 = vld [vmem:[%s1 + $0x18] sm:$0xf]
  %v409 = vld [vmem:[%s1 + $0x1c] sm:$0xf]
  %v418 = vunpack.c.l.b16 %v402
  %v419 = vunpack.c.l.b16 %v403
  %v420 = vunpack.c.l.b16 %v404
  %v421 = vunpack.c.l.b16 %v405
  %v422 = vunpack.c.l.b16 %v406
  %v423 = vunpack.c.l.b16 %v407
  %v424 = vunpack.c.l.b16 %v408
  %v425 = vunpack.c.l.b16 %v409
  %v426 = vpack.c.b16 %v419, %v418
  %v427 = vpack.c.b16 %v421, %v420
  %v428 = vpack.c.b16 %v423, %v422
  %v429 = vpack.c.b16 %v425, %v424
  %vm434 = vcmask 523264
  %v436 = vsel %vm434, %v394, 0
  %v439 = vsel %vm434, %v395, 0
  %v442 = vsel %vm434, %v396, 0
  %v445 = vsel %vm434, %v397, 0
  %v448 = vsel %vm434, %v398, 0
  %v451 = vsel %vm434, %v399, 0
  %v454 = vsel %vm434, %v400, 0
  %v457 = vsel %vm434, %v401, 0
  %459 = vmatprep.subr.bf16.mxu0 0
  %460 = vmatpush1.bf16.msra.mxu0 %v426
  %461 = vmatprep.subr.bf16.mxu0 0
  %462 = vmatpush1.bf16.msra.mxu0 %v427
  %463 = vmatprep.subr.bf16.mxu0 0
  %464 = vmatpush1.bf16.msra.mxu0 %v428
  %465 = vmatprep.subr.bf16.mxu0 0
  %466 = vmatpush1.bf16.msra.mxu0 %v429
  %467 = vmatprep.subr.bf16.mxu0 0
  %468 = vmatpush1.bf16.msra.mxu0 0
  %469 = vmatprep.subr.bf16.mxu0 0
  %470 = vmatpush1.bf16.msra.mxu0 0
  %471 = vmatprep.subr.bf16.mxu0 0
  %472 = vmatpush1.bf16.msra.mxu0 0
  %473 = vmatprep.subr.bf16.mxu0 0
  %474 = vmatpush1.bf16.msra.mxu0 0
  %475 = vmatprep.subr.bf16.mxu0 0
  %476 = vmatpush1.bf16.msra.mxu0 0
  %477 = vmatprep.subr.bf16.mxu0 0
  %478 = vmatpush1.bf16.msra.mxu0 0
  %479 = vmatprep.subr.bf16.mxu0 0
  %480 = vmatpush1.bf16.msra.mxu0 0
  %481 = vmatprep.subr.bf16.mxu0 0
  %482 = vmatpush1.bf16.msra.mxu0 0
  %483 = vmatprep.subr.bf16.mxu0 0
  %484 = vmatpush1.bf16.msra.mxu0 0
  %485 = vmatprep.subr.bf16.mxu0 0
  %486 = vmatpush1.bf16.msra.mxu0 0
  %487 = vmatprep.subr.bf16.mxu0 0
  %488 = vmatpush1.bf16.msra.mxu0 0
  %489 = vmatprep.subr.bf16.mxu0 0
  %490 = vmatpush1.bf16.msra.mxu0 0
  %491 = vmatprep.mubr.bf16.mxu0 0
  %492 = vmatmul.mubr.bf16.gmra.mrb[0].mxu0 %v436
  %v493 = vpop.f32.mrb[0].mxu0
  %v494 = vadd.f32 0.0, %v493
  %v495 = vpop.f32.mrb[0].mxu0
  %v496 = vpop.f32.mrb[0].mxu0
  %v497 = vadd.f32 0.0, %v496
  %v498 = vpop.f32.mrb[0].mxu0
  %499 = vmatprep.mubr.bf16.mxu0 0
  %500 = vmatmul.mubr.bf16.gmra.mrb[0].mxu0 %v439
  %v501 = vpop.f32.mrb[0].mxu0
  %v502 = vadd.f32 0.0, %v501
  %v503 = vpop.f32.mrb[0].mxu0
  %v504 = vpop.f32.mrb[0].mxu0
  %v505 = vadd.f32 0.0, %v504
  %v506 = vpop.f32.mrb[0].mxu0
  %507 = vmatprep.mubr.bf16.mxu0 0
  %508 = vmatmul.mubr.bf16.gmra.mrb[0].mxu0 %v442
  %v509 = vpop.f32.mrb[0].mxu0
  %v510 = vadd.f32 0.0, %v509
  %v511 = vpop.f32.mrb[0].mxu0
  %v512 = vpop.f32.mrb[0].mxu0
  %v513 = vadd.f32 0.0, %v512
  %v514 = vpop.f32.mrb[0].mxu0
  %515 = vmatprep.mubr.bf16.mxu0 0
  %516 = vmatmul.mubr.bf16.gmra.mrb[0].mxu0 %v445
  %v517 = vpop.f32.mrb[0].mxu0
  %v518 = vadd.f32 0.0, %v517
  %v519 = vpop.f32.mrb[0].mxu0
  %v520 = vpop.f32.mrb[0].mxu0
  %v521 = vadd.f32 0.0, %v520
  %v522 = vpop.f32.mrb[0].mxu0
  %523 = vmatprep.mubr.bf16.mxu0 0
  %524 = vmatmul.mubr.bf16.gmra.mrb[0].mxu0 %v448
  %v525 = vpop.f32.mrb[0].mxu0
  %v526 = vadd.f32 0.0, %v525
  %v527 = vpop.f32.mrb[0].mxu0
  %v528 = vpop.f32.mrb[0].mxu0
  %v529 = vadd.f32 0.0, %v528
  %v530 = vpop.f32.mrb[0].mxu0
  %531 = vmatprep.mubr.bf16.mxu0 0
  %532 = vmatmul.mubr.bf16.gmra.mrb[0].mxu0 %v451
  %v533 = vpop.f32.mrb[0].mxu0
  %v534 = vadd.f32 0.0, %v533
  %v535 = vpop.f32.mrb[0].mxu0
  %v536 = vpop.f32.mrb[0].mxu0
  %v537 = vadd.f32 0.0, %v536
  %v538 = vpop.f32.mrb[0].mxu0
  %539 = vmatprep.mubr.bf16.mxu0 0
  %540 = vmatmul.mubr.bf16.gmra.mrb[0].mxu0 %v454
  %v541 = vpop.f32.mrb[0].mxu0
  %v542 = vadd.f32 0.0, %v541
  %v543 = vpop.f32.mrb[0].mxu0
  %v544 = vpop.f32.mrb[0].mxu0
  %v545 = vadd.f32 0.0, %v544
  %v546 = vpop.f32.mrb[0].mxu0
  %547 = vmatprep.mubr.bf16.mxu0 0
  %548 = vmatmul.mubr.bf16.gmra.mrb[0].mxu0 %v457
  %v549 = vpop.f32.mrb[0].mxu0
  %v550 = vadd.f32 0.0, %v549
  %v551 = vpop.f32.mrb[0].mxu0
  %v552 = vpop.f32.mrb[0].mxu0
  %v553 = vadd.f32 0.0, %v552
  %v554 = vpop.f32.mrb[0].mxu0
  %555 = vdwg.mxu0
  %v556 = vld [vmem:[%s2] sm:$0x1]
  %v557 = vld [vmem:[%s3] sm:$0x1]
  %vm558 = vcmask 64512
  %v559 = vsel %vm558, %v494, 0.0
  %v560 = vsel %vm558, %v497, 0.0
  %v561 = vadd.f32 %v559, %v560
  %v562 = vsel %vm558, %v502, 0.0
  %v563 = vadd.f32 %v561, %v562
  %v564 = vsel %vm558, %v505, 0.0
  %v565 = vadd.f32 %v563, %v564
  %v566 = vsel %vm558, %v510, 0.0
  %v567 = vadd.f32 %v565, %v566
  %v568 = vsel %vm558, %v513, 0.0
  %v569 = vadd.f32 %v567, %v568
  %v570 = vsel %vm558, %v518, 0.0
  %v571 = vadd.f32 %v569, %v570
  %v572 = vsel %vm558, %v521, 0.0
  %v573 = vadd.f32 %v571, %v572
  %v574 = vsel %vm558, %v526, 0.0
  %v575 = vadd.f32 %v573, %v574
  %v576 = vsel %vm558, %v529, 0.0
  %v577 = vadd.f32 %v575, %v576
  %v578 = vsel %vm558, %v534, 0.0
  %v579 = vadd.f32 %v577, %v578
  %v580 = vsel %vm558, %v537, 0.0
  %v581 = vadd.f32 %v579, %v580
  %v582 = vsel %vm558, %v542, 0.0
  %v583 = vadd.f32 %v581, %v582
  %v584 = vsel %vm558, %v545, 0.0
  %v585 = vadd.f32 %v583, %v584
  %v586 = vsel %vm558, %v550, 0.0
  %v587 = vadd.f32 %v585, %v586
  %v588 = vsel %vm558, %v553, 0.0
  %v589 = vadd.f32 %v587, %v588
  %v590 = vrot.slane %v589, 4
  %v591 = vadd.f32 %v589, %v590
  %v592 = vrot.slane %v591, 2
  %v593 = vadd.f32 %v591, %v592
  %v594 = vrot.slane %v593, 1
  %v595 = vadd.f32 %v593, %v594
  %v596 = vrcp.pop 128.0
  %v597 = vmul.f32 %v595, %v596
  %v598 = vsub.f32 %v494, %v597
  %v599 = vsub.f32 %v497, %v597
  %v600 = vsub.f32 %v502, %v597
  %v601 = vsub.f32 %v505, %v597
  %v602 = vsub.f32 %v510, %v597
  %v603 = vsub.f32 %v513, %v597
  %v604 = vsub.f32 %v518, %v597
  %v605 = vsub.f32 %v521, %v597
  %v606 = vsub.f32 %v526, %v597
  %v607 = vsub.f32 %v529, %v597
  %v608 = vsub.f32 %v534, %v597
  %v609 = vsub.f32 %v537, %v597
  %v610 = vsub.f32 %v542, %v597
  %v611 = vsub.f32 %v545, %v597
  %v612 = vsub.f32 %v550, %v597
  %v613 = vsub.f32 %v553, %v597
  %v614 = vmul.f32 %v598, %v598
  %v615 = vmul.f32 %v599, %v599
  %v616 = vmul.f32 %v600, %v600
  %v617 = vmul.f32 %v601, %v601
  %v618 = vmul.f32 %v602, %v602
  %v619 = vmul.f32 %v603, %v603
  %v620 = vmul.f32 %v604, %v604
  %v621 = vmul.f32 %v605, %v605
  %v622 = vmul.f32 %v606, %v606
  %v623 = vmul.f32 %v607, %v607
  %v624 = vmul.f32 %v608, %v608
  %v625 = vmul.f32 %v609, %v609
  %v626 = vmul.f32 %v610, %v610
  %v627 = vmul.f32 %v611, %v611
  %v628 = vmul.f32 %v612, %v612
  %v629 = vmul.f32 %v613, %v613
  %v630 = vsel %vm558, %v614, 0.0
  %v631 = vsel %vm558, %v615, 0.0
  %v632 = vadd.f32 %v630, %v631
  %v633 = vsel %vm558, %v616, 0.0
  %v634 = vadd.f32 %v632, %v633
  %v635 = vsel %vm558, %v617, 0.0
  %v636 = vadd.f32 %v634, %v635
  %v637 = vsel %vm558, %v618, 0.0
  %v638 = vadd.f32 %v636, %v637
  %v639 = vsel %vm558, %v619, 0.0
  %v640 = vadd.f32 %v638, %v639
  %v641 = vsel %vm558, %v620, 0.0
  %v642 = vadd.f32 %v640, %v641
  %v643 = vsel %vm558, %v621, 0.0
  %v644 = vadd.f32 %v642, %v643
  %v645 = vsel %vm558, %v622, 0.0
  %v646 = vadd.f32 %v644, %v645
  %v647 = vsel %vm558, %v623, 0.0
  %v648 = vadd.f32 %v646, %v647
  %v649 = vsel %vm558, %v624, 0.0
  %v650 = vadd.f32 %v648, %v649
  %v651 = vsel %vm558, %v625, 0.0
  %v652 = vadd.f32 %v650, %v651
  %v653 = vsel %vm558, %v626, 0.0
  %v654 = vadd.f32 %v652, %v653
  %v655 = vsel %vm558, %v627, 0.0
  %v656 = vadd.f32 %v654, %v655
  %v657 = vsel %vm558, %v628, 0.0
  %v658 = vadd.f32 %v656, %v657
  %v659 = vsel %vm558, %v629, 0.0
  %v660 = vadd.f32 %v658, %v659
  %v661 = vrot.slane %v660, 4
  %v662 = vadd.f32 %v660, %v661
  %v663 = vrot.slane %v662, 2
  %v664 = vadd.f32 %v662, %v663
  %v665 = vrot.slane %v664, 1
  %v666 = vadd.f32 %v664, %v665
  %v667 = vmul.f32 %v666, %v596
  %v668 = vadd.f32 %v667, 1e-05
  %v669 = vrsqrt.pop %v668
  %v670 = vmul.f32 %v598, %v669
  %v671 = vmul.f32 %v599, %v669
  %v672 = vmul.f32 %v600, %v669
  %v673 = vmul.f32 %v601, %v669
  %v674 = vmul.f32 %v602, %v669
  %v675 = vmul.f32 %v603, %v669
  %v676 = vmul.f32 %v604, %v669
  %v677 = vmul.f32 %v605, %v669
  %v678 = vmul.f32 %v606, %v669
  %v679 = vmul.f32 %v607, %v669
  %v680 = vmul.f32 %v608, %v669
  %v681 = vmul.f32 %v609, %v669
  %v682 = vmul.f32 %v610, %v669
  %v683 = vmul.f32 %v611, %v669
  %v684 = vmul.f32 %v612, %v669
  %v685 = vmul.f32 %v613, %v669
  %v687 = vlaneseq
  %v688 = vshrl.u32 %v687, 7
  %v689 = vsub.s32 0, %v688
  %v690 = vrot.slane %v556, %v689
  %v692 = vmul.f32 %v670, %v690
  %v693 = vmul.f32 %v671, %v690
  %v694 = vmul.f32 %v672, %v690
  %v695 = vmul.f32 %v673, %v690
  %v696 = vmul.f32 %v674, %v690
  %v697 = vmul.f32 %v675, %v690
  %v698 = vmul.f32 %v676, %v690
  %v699 = vmul.f32 %v677, %v690
  %v700 = vmul.f32 %v678, %v690
  %v701 = vmul.f32 %v679, %v690
  %v702 = vmul.f32 %v680, %v690
  %v703 = vmul.f32 %v681, %v690
  %v704 = vmul.f32 %v682, %v690
  %v705 = vmul.f32 %v683, %v690
  %v706 = vmul.f32 %v684, %v690
  %v707 = vmul.f32 %v685, %v690
  %v709 = vlaneseq
  %v710 = vshrl.u32 %v709, 7
  %v711 = vsub.s32 0, %v710
  %v712 = vrot.slane %v557, %v711
  %v714 = vadd.f32 %v692, %v712
  %v715 = vadd.f32 %v693, %v712
  %v716 = vadd.f32 %v694, %v712
  %v717 = vadd.f32 %v695, %v712
  %v718 = vadd.f32 %v696, %v712
  %v719 = vadd.f32 %v697, %v712
  %v720 = vadd.f32 %v698, %v712
  %v721 = vadd.f32 %v699, %v712
  %v722 = vadd.f32 %v700, %v712
  %v723 = vadd.f32 %v701, %v712
  %v724 = vadd.f32 %v702, %v712
  %v725 = vadd.f32 %v703, %v712
  %v726 = vadd.f32 %v704, %v712
  %v727 = vadd.f32 %v705, %v712
  %v728 = vadd.f32 %v706, %v712
  %v729 = vadd.f32 %v707, %v712
  %v730 = vmax.f32 %v714, 0.0
  %v731 = vmax.f32 %v715, 0.0
  %v732 = vmax.f32 %v716, 0.0
  %v733 = vmax.f32 %v717, 0.0
  %v734 = vmax.f32 %v718, 0.0
  %v735 = vmax.f32 %v719, 0.0
  %v736 = vmax.f32 %v720, 0.0
  %v737 = vmax.f32 %v721, 0.0
  %v738 = vmax.f32 %v722, 0.0
  %v739 = vmax.f32 %v723, 0.0
  %v740 = vmax.f32 %v724, 0.0
  %v741 = vmax.f32 %v725, 0.0
  %v742 = vmax.f32 %v726, 0.0
  %v743 = vmax.f32 %v727, 0.0
  %v744 = vmax.f32 %v728, 0.0
  %v745 = vmax.f32 %v729, 0.0
  %746 = vst.msk [vmem:[#allocation2] sm:$0xff] %vm558, 0.0
  %vm747 = vcmask 58368
  %748 = vst.msk [vmem:[#allocation2 + $0x8] sm:$0x3] %vm747, 0.0
  %749 = vst.msk [vmem:[#allocation2 + $0xa0] sm:$0xff] %vm558, 0.0
  %750 = vst.msk [vmem:[#allocation2 + $0xa8] sm:$0x3] %vm747, 0.0
  %s751 = scalar_lea.vmem [#allocation2], 144
  %752 = vst.msk [vmem:[%s751] sm:$0xff] %vm558, 0.0
  %753 = vst.msk [vmem:[%s751 + $0x8] sm:$0x3] %vm747, 0.0
  %754 = vst.msk [vmem:[%s751 + $0xa0] sm:$0xff] %vm558, 0.0
  %755 = vst.msk [vmem:[%s751 + $0xa8] sm:$0x3] %vm747, 0.0
  %s756 = scalar_lea.vmem [#allocation2], 16
  %vm757 = vcmask 57344
  %758 = vst.msk [vmem:[%s756] sm:$0x1] %vm757, 0.0
  %759 = vst.msk [vmem:[%s756 + $0x10] sm:$0x1] %vm757, 0.0
  %760 = vst.msk [vmem:[%s756 + $0x20] sm:$0x1] %vm757, 0.0
  %761 = vst.msk [vmem:[%s756 + $0x30] sm:$0x1] %vm757, 0.0
  %762 = vst.msk [vmem:[%s756 + $0x40] sm:$0x1] %vm757, 0.0
  %763 = vst.msk [vmem:[%s756 + $0x50] sm:$0x1] %vm757, 0.0
  %764 = vst.msk [vmem:[%s756 + $0x60] sm:$0x1] %vm757, 0.0
  %765 = vst.msk [vmem:[%s756 + $0x70] sm:$0x1] %vm757, 0.0
  %766 = vst.msk [vmem:[%s756 + $0xa0] sm:$0x1] %vm757, 0.0
  %767 = vst.msk [vmem:[%s756 + $0xb0] sm:$0x1] %vm757, 0.0
  %768 = vst.msk [vmem:[%s756 + $0xc0] sm:$0x1] %vm757, 0.0
  %769 = vst.msk [vmem:[%s756 + $0xd0] sm:$0x1] %vm757, 0.0
  %770 = vst.msk [vmem:[%s756 + $0xe0] sm:$0x1] %vm757, 0.0
  %771 = vst.msk [vmem:[%s756 + $0xf0] sm:$0x1] %vm757, 0.0
  %772 = vst.msk [vmem:[%s756 + $0x100] sm:$0x1] %vm757, 0.0
  %773 = vst.msk [vmem:[%s756 + $0x110] sm:$0x1] %vm757, 0.0
  %774 = vst.msk [vmem:[%s756 + $0x9] sm:$0x1] %vm757, 0.0
  %775 = vst.msk [vmem:[%s756 + $0x19] sm:$0x1] %vm757, 0.0
  %776 = vst.msk [vmem:[%s756 + $0x29] sm:$0x1] %vm757, 0.0
  %777 = vst.msk [vmem:[%s756 + $0x39] sm:$0x1] %vm757, 0.0
  %778 = vst.msk [vmem:[%s756 + $0x49] sm:$0x1] %vm757, 0.0
  %779 = vst.msk [vmem:[%s756 + $0x59] sm:$0x1] %vm757, 0.0
  %780 = vst.msk [vmem:[%s756 + $0x69] sm:$0x1] %vm757, 0.0
  %781 = vst.msk [vmem:[%s756 + $0x79] sm:$0x1] %vm757, 0.0
  %782 = vst.msk [vmem:[%s756 + $0xa9] sm:$0x1] %vm757, 0.0
  %783 = vst.msk [vmem:[%s756 + $0xb9] sm:$0x1] %vm757, 0.0
  %784 = vst.msk [vmem:[%s756 + $0xc9] sm:$0x1] %vm757, 0.0
  %785 = vst.msk [vmem:[%s756 + $0xd9] sm:$0x1] %vm757, 0.0
  %786 = vst.msk [vmem:[%s756 + $0xe9] sm:$0x1] %vm757, 0.0
  %787 = vst.msk [vmem:[%s756 + $0xf9] sm:$0x1] %vm757, 0.0
  %788 = vst.msk [vmem:[%s756 + $0x109] sm:$0x1] %vm757, 0.0
  %789 = vst.msk [vmem:[%s756 + $0x119] sm:$0x1] %vm757, 0.0
  %790 = vst.msk [vmem:[%s756 + $0x1] sm:$0xff] %vm558, %v730
  %791 = vst.msk [vmem:[%s756 + $0x11] sm:$0xff] %vm558, %v731
  %792 = vst.msk [vmem:[%s756 + $0x21] sm:$0xff] %vm558, %v732
  %793 = vst.msk [vmem:[%s756 + $0x31] sm:$0xff] %vm558, %v733
  %794 = vst.msk [vmem:[%s756 + $0x41] sm:$0xff] %vm558, %v734
  %795 = vst.msk [vmem:[%s756 + $0x51] sm:$0xff] %vm558, %v735
  %796 = vst.msk [vmem:[%s756 + $0x61] sm:$0xff] %vm558, %v736
  %797 = vst.msk [vmem:[%s756 + $0x71] sm:$0xff] %vm558, %v737
  %798 = vst.msk [vmem:[%s756 + $0xa1] sm:$0xff] %vm558, %v738
  %799 = vst.msk [vmem:[%s756 + $0xb1] sm:$0xff] %vm558, %v739
  %800 = vst.msk [vmem:[%s756 + $0xc1] sm:$0xff] %vm558, %v740
  %801 = vst.msk [vmem:[%s756 + $0xd1] sm:$0xff] %vm558, %v741
  %802 = vst.msk [vmem:[%s756 + $0xe1] sm:$0xff] %vm558, %v742
  %803 = vst.msk [vmem:[%s756 + $0xf1] sm:$0xff] %vm558, %v743
  %804 = vst.msk [vmem:[%s756 + $0x101] sm:$0xff] %vm558, %v744
  %805 = vst.msk [vmem:[%s756 + $0x111] sm:$0xff] %vm558, %v745
  %v806 = vld [vmem:[#allocation2] sm:$0xff]
  %v807 = vld [vmem:[#allocation2 + $0x10] sm:$0xff]
  %v808 = vld [vmem:[#allocation2 + $0x20] sm:$0xff]
  %v809 = vld [vmem:[#allocation2 + $0x30] sm:$0xff]
  %v810 = vld [vmem:[#allocation2 + $0x40] sm:$0xff]
  %v811 = vld [vmem:[#allocation2 + $0x50] sm:$0xff]
  %v812 = vld [vmem:[#allocation2 + $0x60] sm:$0xff]
  %v813 = vld [vmem:[#allocation2 + $0x70] sm:$0xff]
  %v814 = vld [vmem:[#allocation2 + $0xa0] sm:$0xff]
  %v815 = vld [vmem:[#allocation2 + $0xb0] sm:$0xff]
  %v816 = vld [vmem:[#allocation2 + $0xc0] sm:$0xff]
  %v817 = vld [vmem:[#allocation2 + $0xd0] sm:$0xff]
  %v818 = vld [vmem:[#allocation2 + $0xe0] sm:$0xff]
  %v819 = vld [vmem:[#allocation2 + $0xf0] sm:$0xff]
  %v820 = vld [vmem:[#allocation2 + $0x100] sm:$0xff]
  %v821 = vld [vmem:[#allocation2 + $0x110] sm:$0xff]
  %v822 = vld [vmem:[#allocation2 + $0x1] sm:$0xff]
  %v823 = vld [vmem:[#allocation2 + $0x11] sm:$0xff]
  %v824 = vld [vmem:[#allocation2 + $0x21] sm:$0xff]
  %v825 = vld [vmem:[#allocation2 + $0x31] sm:$0xff]
  %v826 = vld [vmem:[#allocation2 + $0x41] sm:$0xff]
  %v827 = vld [vmem:[#allocation2 + $0x51] sm:$0xff]
  %v828 = vld [vmem:[#allocation2 + $0x61] sm:$0xff]
  %v829 = vld [vmem:[#allocation2 + $0x71] sm:$0xff]
  %v830 = vld [vmem:[#allocation2 + $0xa1] sm:$0xff]
  %v831 = vld [vmem:[#allocation2 + $0xb1] sm:$0xff]
  %v832 = vld [vmem:[#allocation2 + $0xc1] sm:$0xff]
  %v833 = vld [vmem:[#allocation2 + $0xd1] sm:$0xff]
  %v834 = vld [vmem:[#allocation2 + $0xe1] sm:$0xff]
  %v835 = vld [vmem:[#allocation2 + $0xf1] sm:$0xff]
  %v836 = vld [vmem:[#allocation2 + $0x101] sm:$0xff]
  %v837 = vld [vmem:[#allocation2 + $0x111] sm:$0xff]
  %v838 = vld [vmem:[#allocation2 + $0x2] sm:$0xff]
  %v839 = vld [vmem:[#allocation2 + $0x12] sm:$0xff]
  %v840 = vld [vmem:[#allocation2 + $0x22] sm:$0xff]
  %v841 = vld [vmem:[#allocation2 + $0x32] sm:$0xff]
  %v842 = vld [vmem:[#allocation2 + $0x42] sm:$0xff]
  %v843 = vld [vmem:[#allocation2 + $0x52] sm:$0xff]
  %v844 = vld [vmem:[#allocation2 + $0x62] sm:$0xff]
  %v845 = vld [vmem:[#allocation2 + $0x72] sm:$0xff]
  %v846 = vld [vmem:[#allocation2 + $0xa2] sm:$0xff]
  %v847 = vld [vmem:[#allocation2 + $0xb2] sm:$0xff]
  %v848 = vld [vmem:[#allocation2 + $0xc2] sm:$0xff]
  %v849 = vld [vmem:[#allocation2 + $0xd2] sm:$0xff]
  %v850 = vld [vmem:[#allocation2 + $0xe2] sm:$0xff]
  %v851 = vld [vmem:[#allocation2 + $0xf2] sm:$0xff]
  %v852 = vld [vmem:[#allocation2 + $0x102] sm:$0xff]
  %v853 = vld [vmem:[#allocation2 + $0x112] sm:$0xff]
  %v854 = vld [vmem:[%s756] sm:$0xff]
  %v855 = vld [vmem:[%s756 + $0x10] sm:$0xff]
  %v856 = vld [vmem:[%s756 + $0x20] sm:$0xff]
  %v857 = vld [vmem:[%s756 + $0x30] sm:$0xff]
  %v858 = vld [vmem:[%s756 + $0x40] sm:$0xff]
  %v859 = vld [vmem:[%s756 + $0x50] sm:$0xff]
  %v860 = vld [vmem:[%s756 + $0x60] sm:$0xff]
  %v861 = vld [vmem:[%s756 + $0x70] sm:$0xff]
  %v862 = vld [vmem:[%s756 + $0xa0] sm:$0xff]
  %v863 = vld [vmem:[%s756 + $0xb0] sm:$0xff]
  %v864 = vld [vmem:[%s756 + $0xc0] sm:$0xff]
  %v865 = vld [vmem:[%s756 + $0xd0] sm:$0xff]
  %v866 = vld [vmem:[%s756 + $0xe0] sm:$0xff]
  %v867 = vld [vmem:[%s756 + $0xf0] sm:$0xff]
  %v868 = vld [vmem:[%s756 + $0x100] sm:$0xff]
  %v869 = vld [vmem:[%s756 + $0x110] sm:$0xff]
  %v870 = vld [vmem:[%s756 + $0x1] sm:$0xff]
  %v871 = vld [vmem:[%s756 + $0x11] sm:$0xff]
  %v872 = vld [vmem:[%s756 + $0x21] sm:$0xff]
  %v873 = vld [vmem:[%s756 + $0x31] sm:$0xff]
  %v874 = vld [vmem:[%s756 + $0x41] sm:$0xff]
  %v875 = vld [vmem:[%s756 + $0x51] sm:$0xff]
  %v876 = vld [vmem:[%s756 + $0x61] sm:$0xff]
  %v877 = vld [vmem:[%s756 + $0x71] sm:$0xff]
  %v878 = vld [vmem:[%s756 + $0xa1] sm:$0xff]
  %v879 = vld [vmem:[%s756 + $0xb1] sm:$0xff]
  %v880 = vld [vmem:[%s756 + $0xc1] sm:$0xff]
  %v881 = vld [vmem:[%s756 + $0xd1] sm:$0xff]
  %v882 = vld [vmem:[%s756 + $0xe1] sm:$0xff]
  %v883 = vld [vmem:[%s756 + $0xf1] sm:$0xff]
  %v884 = vld [vmem:[%s756 + $0x101] sm:$0xff]
  %v885 = vld [vmem:[%s756 + $0x111] sm:$0xff]
  %v886 = vld [vmem:[%s756 + $0x2] sm:$0xff]
  %v887 = vld [vmem:[%s756 + $0x12] sm:$0xff]
  %v888 = vld [vmem:[%s756 + $0x22] sm:$0xff]
  %v889 = vld [vmem:[%s756 + $0x32] sm:$0xff]
  %v890 = vld [vmem:[%s756 + $0x42] sm:$0xff]
  %v891 = vld [vmem:[%s756 + $0x52] sm:$0xff]
  %v892 = vld [vmem:[%s756 + $0x62] sm:$0xff]
  %v893 = vld [vmem:[%s756 + $0x72] sm:$0xff]
  %v894 = vld [vmem:[%s756 + $0xa2] sm:$0xff]
  %v895 = vld [vmem:[%s756 + $0xb2] sm:$0xff]
  %v896 = vld [vmem:[%s756 + $0xc2] sm:$0xff]
  %v897 = vld [vmem:[%s756 + $0xd2] sm:$0xff]
  %v898 = vld [vmem:[%s756 + $0xe2] sm:$0xff]
  %v899 = vld [vmem:[%s756 + $0xf2] sm:$0xff]
  %v900 = vld [vmem:[%s756 + $0x102] sm:$0xff]
  %v901 = vld [vmem:[%s756 + $0x112] sm:$0xff]
  %s902 = scalar_lea.vmem [#allocation2], 32
  %v903 = vld [vmem:[%s902] sm:$0xff]
  %v904 = vld [vmem:[%s902 + $0x10] sm:$0xff]
  %v905 = vld [vmem:[%s902 + $0x20] sm:$0xff]
  %v906 = vld [vmem:[%s902 + $0x30] sm:$0xff]
  %v907 = vld [vmem:[%s902 + $0x40] sm:$0xff]
  %v908 = vld [vmem:[%s902 + $0x50] sm:$0xff]
  %v909 = vld [vmem:[%s902 + $0x60] sm:$0xff]
  %v910 = vld [vmem:[%s902 + $0x70] sm:$0xff]
  %v911 = vld [vmem:[%s902 + $0xa0] sm:$0xff]
  %v912 = vld [vmem:[%s902 + $0xb0] sm:$0xff]
  %v913 = vld [vmem:[%s902 + $0xc0] sm:$0xff]
  %v914 = vld [vmem:[%s902 + $0xd0] sm:$0xff]
  %v915 = vld [vmem:[%s902 + $0xe0] sm:$0xff]
  %v916 = vld [vmem:[%s902 + $0xf0] sm:$0xff]
  %v917 = vld [vmem:[%s902 + $0x100] sm:$0xff]
  %v918 = vld [vmem:[%s902 + $0x110] sm:$0xff]
  %v919 = vld [vmem:[%s902 + $0x1] sm:$0xff]
  %v920 = vld [vmem:[%s902 + $0x11] sm:$0xff]
  %v921 = vld [vmem:[%s902 + $0x21] sm:$0xff]
  %v922 = vld [vmem:[%s902 + $0x31] sm:$0xff]
  %v923 = vld [vmem:[%s902 + $0x41] sm:$0xff]
  %v924 = vld [vmem:[%s902 + $0x51] sm:$0xff]
  %v925 = vld [vmem:[%s902 + $0x61] sm:$0xff]
  %v926 = vld [vmem:[%s902 + $0x71] sm:$0xff]
  %v927 = vld [vmem:[%s902 + $0xa1] sm:$0xff]
  %v928 = vld [vmem:[%s902 + $0xb1] sm:$0xff]
  %v929 = vld [vmem:[%s902 + $0xc1] sm:$0xff]
  %v930 = vld [vmem:[%s902 + $0xd1] sm:$0xff]
  %v931 = vld [vmem:[%s902 + $0xe1] sm:$0xff]
  %v932 = vld [vmem:[%s902 + $0xf1] sm:$0xff]
  %v933 = vld [vmem:[%s902 + $0x101] sm:$0xff]
  %v934 = vld [vmem:[%s902 + $0x111] sm:$0xff]
  %v935 = vld [vmem:[%s902 + $0x2] sm:$0xff]
  %v936 = vld [vmem:[%s902 + $0x12] sm:$0xff]
  %v937 = vld [vmem:[%s902 + $0x22] sm:$0xff]
  %v938 = vld [vmem:[%s902 + $0x32] sm:$0xff]
  %v939 = vld [vmem:[%s902 + $0x42] sm:$0xff]
  %v940 = vld [vmem:[%s902 + $0x52] sm:$0xff]
  %v941 = vld [vmem:[%s902 + $0x62] sm:$0xff]
  %v942 = vld [vmem:[%s902 + $0x72] sm:$0xff]
  %v943 = vld [vmem:[%s902 + $0xa2] sm:$0xff]
  %v944 = vld [vmem:[%s902 + $0xb2] sm:$0xff]
  %v945 = vld [vmem:[%s902 + $0xc2] sm:$0xff]
  %v946 = vld [vmem:[%s902 + $0xd2] sm:$0xff]
  %v947 = vld [vmem:[%s902 + $0xe2] sm:$0xff]
  %v948 = vld [vmem:[%s902 + $0xf2] sm:$0xff]
  %v949 = vld [vmem:[%s902 + $0x102] sm:$0xff]
  %v950 = vld [vmem:[%s902 + $0x112] sm:$0xff]
  %967 = vrot.lane.b32.xlu0 %v822, 8
  %v968 = vpop.permute.xlu0 %967
  %969 = vrot.lane.b32.xlu0 %v823, 8
  %v970 = vpop.permute.xlu0 %969
  %971 = vrot.lane.b32.xlu0 %v824, 8
  %v972 = vpop.permute.xlu0 %971
  %973 = vrot.lane.b32.xlu0 %v825, 8
  %v974 = vpop.permute.xlu0 %973
  %975 = vrot.lane.b32.xlu0 %v826, 8
  %v976 = vpop.permute.xlu0 %975
  %977 = vrot.lane.b32.xlu0 %v827, 8
  %v978 = vpop.permute.xlu0 %977
  %979 = vrot.lane.b32.xlu0 %v828, 8
  %v980 = vpop.permute.xlu0 %979
  %981 = vrot.lane.b32.xlu0 %v829, 8
  %v982 = vpop.permute.xlu0 %981
  %983 = vrot.lane.b32.xlu0 %v830, 8
  %v984 = vpop.permute.xlu0 %983
  %985 = vrot.lane.b32.xlu0 %v831, 8
  %v986 = vpop.permute.xlu0 %985
  %987 = vrot.lane.b32.xlu0 %v832, 8
  %v988 = vpop.permute.xlu0 %987
  %989 = vrot.lane.b32.xlu0 %v833, 8
  %v990 = vpop.permute.xlu0 %989
  %991 = vrot.lane.b32.xlu0 %v834, 8
  %v992 = vpop.permute.xlu0 %991
  %993 = vrot.lane.b32.xlu0 %v835, 8
  %v994 = vpop.permute.xlu0 %993
  %995 = vrot.lane.b32.xlu0 %v836, 8
  %v996 = vpop.permute.xlu0 %995
  %997 = vrot.lane.b32.xlu0 %v837, 8
  %v998 = vpop.permute.xlu0 %997
  %1031 = vrot.lane.b32.xlu0 %v838, 16
  %v1032 = vpop.permute.xlu0 %1031
  %1033 = vrot.lane.b32.xlu0 %v839, 16
  %v1034 = vpop.permute.xlu0 %1033
  %1035 = vrot.lane.b32.xlu0 %v840, 16
  %v1036 = vpop.permute.xlu0 %1035
  %1037 = vrot.lane.b32.xlu0 %v841, 16
  %v1038 = vpop.permute.xlu0 %1037
  %1039 = vrot.lane.b32.xlu0 %v842, 16
  %v1040 = vpop.permute.xlu0 %1039
  %1041 = vrot.lane.b32.xlu0 %v843, 16
  %v1042 = vpop.permute.xlu0 %1041
  %1043 = vrot.lane.b32.xlu0 %v844, 16
  %v1044 = vpop.permute.xlu0 %1043
  %1045 = vrot.lane.b32.xlu0 %v845, 16
  %v1046 = vpop.permute.xlu0 %1045
  %1047 = vrot.lane.b32.xlu0 %v846, 16
  %v1048 = vpop.permute.xlu0 %1047
  %1049 = vrot.lane.b32.xlu0 %v847, 16
  %v1050 = vpop.permute.xlu0 %1049
  %1051 = vrot.lane.b32.xlu0 %v848, 16
  %v1052 = vpop.permute.xlu0 %1051
  %1053 = vrot.lane.b32.xlu0 %v849, 16
  %v1054 = vpop.permute.xlu0 %1053
  %1055 = vrot.lane.b32.xlu0 %v850, 16
  %v1056 = vpop.permute.xlu0 %1055
  %1057 = vrot.lane.b32.xlu0 %v851, 16
  %v1058 = vpop.permute.xlu0 %1057
  %1059 = vrot.lane.b32.xlu0 %v852, 16
  %v1060 = vpop.permute.xlu0 %1059
  %1061 = vrot.lane.b32.xlu0 %v853, 16
  %v1062 = vpop.permute.xlu0 %1061
  %1095 = vrot.lane.b32.xlu0 %v854, 24
  %v1096 = vpop.permute.xlu0 %1095
  %1097 = vrot.lane.b32.xlu0 %v855, 24
  %v1098 = vpop.permute.xlu0 %1097
  %1099 = vrot.lane.b32.xlu0 %v856, 24
  %v1100 = vpop.permute.xlu0 %1099
  %1101 = vrot.lane.b32.xlu0 %v857, 24
  %v1102 = vpop.permute.xlu0 %1101
  %1103 = vrot.lane.b32.xlu0 %v858, 24
  %v1104 = vpop.permute.xlu0 %1103
  %1105 = vrot.lane.b32.xlu0 %v859, 24
  %v1106 = vpop.permute.xlu0 %1105
  %1107 = vrot.lane.b32.xlu0 %v860, 24
  %v1108 = vpop.permute.xlu0 %1107
  %1109 = vrot.lane.b32.xlu0 %v861, 24
  %v1110 = vpop.permute.xlu0 %1109
  %1111 = vrot.lane.b32.xlu0 %v862, 24
  %v1112 = vpop.permute.xlu0 %1111
  %1113 = vrot.lane.b32.xlu0 %v863, 24
  %v1114 = vpop.permute.xlu0 %1113
  %1115 = vrot.lane.b32.xlu0 %v864, 24
  %v1116 = vpop.permute.xlu0 %1115
  %1117 = vrot.lane.b32.xlu0 %v865, 24
  %v1118 = vpop.permute.xlu0 %1117
  %1119 = vrot.lane.b32.xlu0 %v866, 24
  %v1120 = vpop.permute.xlu0 %1119
  %1121 = vrot.lane.b32.xlu0 %v867, 24
  %v1122 = vpop.permute.xlu0 %1121
  %1123 = vrot.lane.b32.xlu0 %v868, 24
  %v1124 = vpop.permute.xlu0 %1123
  %1125 = vrot.lane.b32.xlu0 %v869, 24
  %v1126 = vpop.permute.xlu0 %1125
  %1159 = vrot.lane.b32.xlu0 %v870, 32
  %v1160 = vpop.permute.xlu0 %1159
  %1161 = vrot.lane.b32.xlu0 %v871, 32
  %v1162 = vpop.permute.xlu0 %1161
  %1163 = vrot.lane.b32.xlu0 %v872, 32
  %v1164 = vpop.permute.xlu0 %1163
  %1165 = vrot.lane.b32.xlu0 %v873, 32
  %v1166 = vpop.permute.xlu0 %1165
  %1167 = vrot.lane.b32.xlu0 %v874, 32
  %v1168 = vpop.permute.xlu0 %1167
  %1169 = vrot.lane.b32.xlu0 %v875, 32
  %v1170 = vpop.permute.xlu0 %1169
  %1171 = vrot.lane.b32.xlu0 %v876, 32
  %v1172 = vpop.permute.xlu0 %1171
  %1173 = vrot.lane.b32.xlu0 %v877, 32
  %v1174 = vpop.permute.xlu0 %1173
  %1175 = vrot.lane.b32.xlu0 %v878, 32
  %v1176 = vpop.permute.xlu0 %1175
  %1177 = vrot.lane.b32.xlu0 %v879, 32
  %v1178 = vpop.permute.xlu0 %1177
  %1179 = vrot.lane.b32.xlu0 %v880, 32
  %v1180 = vpop.permute.xlu0 %1179
  %1181 = vrot.lane.b32.xlu0 %v881, 32
  %v1182 = vpop.permute.xlu0 %1181
  %1183 = vrot.lane.b32.xlu0 %v882, 32
  %v1184 = vpop.permute.xlu0 %1183
  %1185 = vrot.lane.b32.xlu0 %v883, 32
  %v1186 = vpop.permute.xlu0 %1185
  %1187 = vrot.lane.b32.xlu0 %v884, 32
  %v1188 = vpop.permute.xlu0 %1187
  %1189 = vrot.lane.b32.xlu0 %v885, 32
  %v1190 = vpop.permute.xlu0 %1189
  %1223 = vrot.lane.b32.xlu0 %v886, 40
  %v1224 = vpop.permute.xlu0 %1223
  %1225 = vrot.lane.b32.xlu0 %v887, 40
  %v1226 = vpop.permute.xlu0 %1225
  %1227 = vrot.lane.b32.xlu0 %v888, 40
  %v1228 = vpop.permute.xlu0 %1227
  %1229 = vrot.lane.b32.xlu0 %v889, 40
  %v1230 = vpop.permute.xlu0 %1229
  %1231 = vrot.lane.b32.xlu0 %v890, 40
  %v1232 = vpop.permute.xlu0 %1231
  %1233 = vrot.lane.b32.xlu0 %v891, 40
  %v1234 = vpop.permute.xlu0 %1233
  %1235 = vrot.lane.b32.xlu0 %v892, 40
  %v1236 = vpop.permute.xlu0 %1235
  %1237 = vrot.lane.b32.xlu0 %v893, 40
  %v1238 = vpop.permute.xlu0 %1237
  %1239 = vrot.lane.b32.xlu0 %v894, 40
  %v1240 = vpop.permute.xlu0 %1239
  %1241 = vrot.lane.b32.xlu0 %v895, 40
  %v1242 = vpop.permute.xlu0 %1241
  %1243 = vrot.lane.b32.xlu0 %v896, 40
  %v1244 = vpop.permute.xlu0 %1243
  %1245 = vrot.lane.b32.xlu0 %v897, 40
  %v1246 = vpop.permute.xlu0 %1245
  %1247 = vrot.lane.b32.xlu0 %v898, 40
  %v1248 = vpop.permute.xlu0 %1247
  %1249 = vrot.lane.b32.xlu0 %v899, 40
  %v1250 = vpop.permute.xlu0 %1249
  %1251 = vrot.lane.b32.xlu0 %v900, 40
  %v1252 = vpop.permute.xlu0 %1251
  %1253 = vrot.lane.b32.xlu0 %v901, 40
  %v1254 = vpop.permute.xlu0 %1253
  %1287 = vrot.lane.b32.xlu0 %v903, 48
  %v1288 = vpop.permute.xlu0 %1287
  %1289 = vrot.lane.b32.xlu0 %v904, 48
  %v1290 = vpop.permute.xlu0 %1289
  %1291 = vrot.lane.b32.xlu0 %v905, 48
  %v1292 = vpop.permute.xlu0 %1291
  %1293 = vrot.lane.b32.xlu0 %v906, 48
  %v1294 = vpop.permute.xlu0 %1293
  %1295 = vrot.lane.b32.xlu0 %v907, 48
  %v1296 = vpop.permute.xlu0 %1295
  %1297 = vrot.lane.b32.xlu0 %v908, 48
  %v1298 = vpop.permute.xlu0 %1297
  %1299 = vrot.lane.b32.xlu0 %v909, 48
  %v1300 = vpop.permute.xlu0 %1299
  %1301 = vrot.lane.b32.xlu0 %v910, 48
  %v1302 = vpop.permute.xlu0 %1301
  %1303 = vrot.lane.b32.xlu0 %v911, 48
  %v1304 = vpop.permute.xlu0 %1303
  %1305 = vrot.lane.b32.xlu0 %v912, 48
  %v1306 = vpop.permute.xlu0 %1305
  %1307 = vrot.lane.b32.xlu0 %v913, 48
  %v1308 = vpop.permute.xlu0 %1307
  %1309 = vrot.lane.b32.xlu0 %v914, 48
  %v1310 = vpop.permute.xlu0 %1309
  %1311 = vrot.lane.b32.xlu0 %v915, 48
  %v1312 = vpop.permute.xlu0 %1311
  %1313 = vrot.lane.b32.xlu0 %v916, 48
  %v1314 = vpop.permute.xlu0 %1313
  %1315 = vrot.lane.b32.xlu0 %v917, 48
  %v1316 = vpop.permute.xlu0 %1315
  %1317 = vrot.lane.b32.xlu0 %v918, 48
  %v1318 = vpop.permute.xlu0 %1317
  %1351 = vrot.lane.b32.xlu0 %v919, 56
  %v1352 = vpop.permute.xlu0 %1351
  %1353 = vrot.lane.b32.xlu0 %v920, 56
  %v1354 = vpop.permute.xlu0 %1353
  %1355 = vrot.lane.b32.xlu0 %v921, 56
  %v1356 = vpop.permute.xlu0 %1355
  %1357 = vrot.lane.b32.xlu0 %v922, 56
  %v1358 = vpop.permute.xlu0 %1357
  %1359 = vrot.lane.b32.xlu0 %v923, 56
  %v1360 = vpop.permute.xlu0 %1359
  %1361 = vrot.lane.b32.xlu0 %v924, 56
  %v1362 = vpop.permute.xlu0 %1361
  %1363 = vrot.lane.b32.xlu0 %v925, 56
  %v1364 = vpop.permute.xlu0 %1363
  %1365 = vrot.lane.b32.xlu0 %v926, 56
  %v1366 = vpop.permute.xlu0 %1365
  %1367 = vrot.lane.b32.xlu0 %v927, 56
  %v1368 = vpop.permute.xlu0 %1367
  %1369 = vrot.lane.b32.xlu0 %v928, 56
  %v1370 = vpop.permute.xlu0 %1369
  %1371 = vrot.lane.b32.xlu0 %v929, 56
  %v1372 = vpop.permute.xlu0 %1371
  %1373 = vrot.lane.b32.xlu0 %v930, 56
  %v1374 = vpop.permute.xlu0 %1373
  %1375 = vrot.lane.b32.xlu0 %v931, 56
  %v1376 = vpop.permute.xlu0 %1375
  %1377 = vrot.lane.b32.xlu0 %v932, 56
  %v1378 = vpop.permute.xlu0 %1377
  %1379 = vrot.lane.b32.xlu0 %v933, 56
  %v1380 = vpop.permute.xlu0 %1379
  %1381 = vrot.lane.b32.xlu0 %v934, 56
  %v1382 = vpop.permute.xlu0 %1381
  %1415 = vrot.lane.b32.xlu0 %v935, 64
  %v1416 = vpop.permute.xlu0 %1415
  %1417 = vrot.lane.b32.xlu0 %v936, 64
  %v1418 = vpop.permute.xlu0 %1417
  %1419 = vrot.lane.b32.xlu0 %v937, 64
  %v1420 = vpop.permute.xlu0 %1419
  %1421 = vrot.lane.b32.xlu0 %v938, 64
  %v1422 = vpop.permute.xlu0 %1421
  %1423 = vrot.lane.b32.xlu0 %v939, 64
  %v1424 = vpop.permute.xlu0 %1423
  %1425 = vrot.lane.b32.xlu0 %v940, 64
  %v1426 = vpop.permute.xlu0 %1425
  %1427 = vrot.lane.b32.xlu0 %v941, 64
  %v1428 = vpop.permute.xlu0 %1427
  %1429 = vrot.lane.b32.xlu0 %v942, 64
  %v1430 = vpop.permute.xlu0 %1429
  %1431 = vrot.lane.b32.xlu0 %v943, 64
  %v1432 = vpop.permute.xlu0 %1431
  %1433 = vrot.lane.b32.xlu0 %v944, 64
  %v1434 = vpop.permute.xlu0 %1433
  %1435 = vrot.lane.b32.xlu0 %v945, 64
  %v1436 = vpop.permute.xlu0 %1435
  %1437 = vrot.lane.b32.xlu0 %v946, 64
  %v1438 = vpop.permute.xlu0 %1437
  %1439 = vrot.lane.b32.xlu0 %v947, 64
  %v1440 = vpop.permute.xlu0 %1439
  %1441 = vrot.lane.b32.xlu0 %v948, 64
  %v1442 = vpop.permute.xlu0 %1441
  %1443 = vrot.lane.b32.xlu0 %v949, 64
  %v1444 = vpop.permute.xlu0 %1443
  %1445 = vrot.lane.b32.xlu0 %v950, 64
  %v1446 = vpop.permute.xlu0 %1445
  %v1463 = vsel %vm558, %v806, %v968
  %v1464 = vsel %vm558, %v807, %v970
  %v1465 = vsel %vm558, %v808, %v972
  %v1466 = vsel %vm558, %v809, %v974
  %v1467 = vsel %vm558, %v810, %v976
  %v1468 = vsel %vm558, %v811, %v978
  %v1469 = vsel %vm558, %v812, %v980
  %v1470 = vsel %vm558, %v813, %v982
  %v1471 = vsel %vm558, %v814, %v984
  %v1472 = vsel %vm558, %v815, %v986
  %v1473 = vsel %vm558, %v816, %v988
  %v1474 = vsel %vm558, %v817, %v990
  %v1475 = vsel %vm558, %v818, %v992
  %v1476 = vsel %vm558, %v819, %v994
  %v1477 = vsel %vm558, %v820, %v996
  %v1478 = vsel %vm558, %v821, %v998
  %v1479 = vsel %vm343, %v1463, %v1032
  %v1480 = vsel %vm343, %v1464, %v1034
  %v1481 = vsel %vm343, %v1465, %v1036
  %v1482 = vsel %vm343, %v1466, %v1038
  %v1483 = vsel %vm343, %v1467, %v1040
  %v1484 = vsel %vm343, %v1468, %v1042
  %v1485 = vsel %vm343, %v1469, %v1044
  %v1486 = vsel %vm343, %v1470, %v1046
  %v1487 = vsel %vm343, %v1471, %v1048
  %v1488 = vsel %vm343, %v1472, %v1050
  %v1489 = vsel %vm343, %v1473, %v1052
  %v1490 = vsel %vm343, %v1474, %v1054
  %v1491 = vsel %vm343, %v1475, %v1056
  %v1492 = vsel %vm343, %v1476, %v1058
  %v1493 = vsel %vm343, %v1477, %v1060
  %v1494 = vsel %vm343, %v1478, %v1062
  %vm1495 = vcmask 195584
  %v1496 = vsel %vm1495, %v1479, %v1096
  %v1497 = vsel %vm1495, %v1480, %v1098
  %v1498 = vsel %vm1495, %v1481, %v1100
  %v1499 = vsel %vm1495, %v1482, %v1102
  %v1500 = vsel %vm1495, %v1483, %v1104
  %v1501 = vsel %vm1495, %v1484, %v1106
  %v1502 = vsel %vm1495, %v1485, %v1108
  %v1503 = vsel %vm1495, %v1486, %v1110
  %v1504 = vsel %vm1495, %v1487, %v1112
  %v1505 = vsel %vm1495, %v1488, %v1114
  %v1506 = vsel %vm1495, %v1489, %v1116
  %v1507 = vsel %vm1495, %v1490, %v1118
  %v1508 = vsel %vm1495, %v1491, %v1120
  %v1509 = vsel %vm1495, %v1492, %v1122
  %v1510 = vsel %vm1495, %v1493, %v1124
  %v1511 = vsel %vm1495, %v1494, %v1126
  %v1512 = vsel %vm360, %v1496, %v1160
  %v1513 = vsel %vm360, %v1497, %v1162
  %v1514 = vsel %vm360, %v1498, %v1164
  %v1515 = vsel %vm360, %v1499, %v1166
  %v1516 = vsel %vm360, %v1500, %v1168
  %v1517 = vsel %vm360, %v1501, %v1170
  %v1518 = vsel %vm360, %v1502, %v1172
  %v1519 = vsel %vm360, %v1503, %v1174
  %v1520 = vsel %vm360, %v1504, %v1176
  %v1521 = vsel %vm360, %v1505, %v1178
  %v1522 = vsel %vm360, %v1506, %v1180
  %v1523 = vsel %vm360, %v1507, %v1182
  %v1524 = vsel %vm360, %v1508, %v1184
  %v1525 = vsel %vm360, %v1509, %v1186
  %v1526 = vsel %vm360, %v1510, %v1188
  %v1527 = vsel %vm360, %v1511, %v1190
  %vm1528 = vcmask 326656
  %v1529 = vsel %vm1528, %v1512, %v1224
  %v1530 = vsel %vm1528, %v1513, %v1226
  %v1531 = vsel %vm1528, %v1514, %v1228
  %v1532 = vsel %vm1528, %v1515, %v1230
  %v1533 = vsel %vm1528, %v1516, %v1232
  %v1534 = vsel %vm1528, %v1517, %v1234
  %v1535 = vsel %vm1528, %v1518, %v1236
  %v1536 = vsel %vm1528, %v1519, %v1238
  %v1537 = vsel %vm1528, %v1520, %v1240
  %v1538 = vsel %vm1528, %v1521, %v1242
  %v1539 = vsel %vm1528, %v1522, %v1244
  %v1540 = vsel %vm1528, %v1523, %v1246
  %v1541 = vsel %vm1528, %v1524, %v1248
  %v1542 = vsel %vm1528, %v1525, %v1250
  %v1543 = vsel %vm1528, %v1526, %v1252
  %v1544 = vsel %vm1528, %v1527, %v1254
  %v1545 = vsel %vm377, %v1529, %v1288
  %v1546 = vsel %vm377, %v1530, %v1290
  %v1547 = vsel %vm377, %v1531, %v1292
  %v1548 = vsel %vm377, %v1532, %v1294
  %v1549 = vsel %vm377, %v1533, %v1296
  %v1550 = vsel %vm377, %v1534, %v1298
  %v1551 = vsel %vm377, %v1535, %v1300
  %v1552 = vsel %vm377, %v1536, %v1302
  %v1553 = vsel %vm377, %v1537, %v1304
  %v1554 = vsel %vm377, %v1538, %v1306
  %v1555 = vsel %vm377, %v1539, %v1308
  %v1556 = vsel %vm377, %v1540, %v1310
  %v1557 = vsel %vm377, %v1541, %v1312
  %v1558 = vsel %vm377, %v1542, %v1314
  %v1559 = vsel %vm377, %v1543, %v1316
  %v1560 = vsel %vm377, %v1544, %v1318
  %vm1561 = vcmask 457728
  %v1562 = vsel %vm1561, %v1545, %v1352
  %v1563 = vsel %vm1561, %v1546, %v1354
  %v1564 = vsel %vm1561, %v1547, %v1356
  %v1565 = vsel %vm1561, %v1548, %v1358
  %v1566 = vsel %vm1561, %v1549, %v1360
  %v1567 = vsel %vm1561, %v1550, %v1362
  %v1568 = vsel %vm1561, %v1551, %v1364
  %v1569 = vsel %vm1561, %v1552, %v1366
  %v1570 = vsel %vm1561, %v1553, %v1368
  %v1571 = vsel %vm1561, %v1554, %v1370
  %v1572 = vsel %vm1561, %v1555, %v1372
  %v1573 = vsel %vm1561, %v1556, %v1374
  %v1574 = vsel %vm1561, %v1557, %v1376
  %v1575 = vsel %vm1561, %v1558, %v1378
  %v1576 = vsel %vm1561, %v1559, %v1380
  %v1577 = vsel %vm1561, %v1560, %v1382
  %v1578 = vsel %vm434, %v1562, %v1416
  %v1579 = vsel %vm434, %v1563, %v1418
  %v1580 = vsel %vm434, %v1564, %v1420
  %v1581 = vsel %vm434, %v1565, %v1422
  %v1582 = vsel %vm434, %v1566, %v1424
  %v1583 = vsel %vm434, %v1567, %v1426
  %v1584 = vsel %vm434, %v1568, %v1428
  %v1585 = vsel %vm434, %v1569, %v1430
  %v1586 = vsel %vm434, %v1570, %v1432
  %v1587 = vsel %vm434, %v1571, %v1434
  %v1588 = vsel %vm434, %v1572, %v1436
  %v1589 = vsel %vm434, %v1573, %v1438
  %v1590 = vsel %vm434, %v1574, %v1440
  %v1591 = vsel %vm434, %v1575, %v1442
  %v1592 = vsel %vm434, %v1576, %v1444
  %v1593 = vsel %vm434, %v1577, %v1446
  %v1594 = vpack.c.bf16 %v1579, %v1578
  %v1595 = vpack.c.bf16 %v1581, %v1580
  %v1596 = vpack.c.bf16 %v1583, %v1582
  %v1597 = vpack.c.bf16 %v1585, %v1584
  %v1598 = vpack.c.bf16 %v1587, %v1586
  %v1599 = vpack.c.bf16 %v1589, %v1588
  %v1600 = vpack.c.bf16 %v1591, %v1590
  %v1601 = vpack.c.bf16 %v1593, %v1592
  %v1602 = vld [vmem:[%s4] sm:$0xf]
  %v1603 = vld [vmem:[%s4 + $0x4] sm:$0xf]
  %v1604 = vld [vmem:[%s4 + $0x8] sm:$0xf]
  %v1605 = vld [vmem:[%s4 + $0xc] sm:$0xf]
  %v1606 = vld [vmem:[%s4 + $0x10] sm:$0xf]
  %v1607 = vld [vmem:[%s4 + $0x14] sm:$0xf]
  %v1608 = vld [vmem:[%s4 + $0x18] sm:$0xf]
  %v1609 = vld [vmem:[%s4 + $0x1c] sm:$0xf]
  %v1610 = vld [vmem:[%s4 + $0x20] sm:$0xf]
  %v1620 = vunpack.c.l.b16 %v1602
  %v1621 = vunpack.c.l.b16 %v1603
  %v1622 = vunpack.c.l.b16 %v1604
  %v1623 = vunpack.c.l.b16 %v1605
  %v1624 = vunpack.c.l.b16 %v1606
  %v1625 = vunpack.c.l.b16 %v1607
  %v1626 = vunpack.c.l.b16 %v1608
  %v1627 = vunpack.c.l.b16 %v1609
  %v1628 = vunpack.c.l.b16 %v1610
  %v1629 = vpack.c.b16 %v1621, %v1620
  %v1630 = vpack.c.b16 %v1623, %v1622
  %v1631 = vpack.c.b16 %v1625, %v1624
  %v1632 = vpack.c.b16 %v1627, %v1626
  %v1633 = vpack.c.b16 %v1628, %v1628
  %vm1638 = vcmask 588800
  %v1640 = vsel %vm1638, %v1594, 0
  %v1643 = vsel %vm1638, %v1595, 0
  %v1646 = vsel %vm1638, %v1596, 0
  %v1649 = vsel %vm1638, %v1597, 0
  %v1652 = vsel %vm1638, %v1598, 0
  %v1655 = vsel %vm1638, %v1599, 0
  %v1658 = vsel %vm1638, %v1600, 0
  %v1661 = vsel %vm1638, %v1601, 0
  %vm1663 = vcmask 1043456
  %v1665 = vsel %vm1663, %v1633, 0
  %1667 = vmatprep.subr.bf16.mxu0 0
  %1668 = vmatpush1.bf16.msra.mxu0 %v1629
  %1669 = vmatprep.subr.bf16.mxu0 0
  %1670 = vmatpush1.bf16.msra.mxu0 %v1630
  %1671 = vmatprep.subr.bf16.mxu0 0
  %1672 = vmatpush1.bf16.msra.mxu0 %v1631
  %1673 = vmatprep.subr.bf16.mxu0 0
  %1674 = vmatpush1.bf16.msra.mxu0 %v1632
  %1675 = vmatprep.subr.bf16.mxu0 0
  %1676 = vmatpush1.bf16.msra.mxu0 %v1665
  %1677 = vmatprep.subr.bf16.mxu0 0
  %1678 = vmatpush1.bf16.msra.mxu0 0
  %1679 = vmatprep.subr.bf16.mxu0 0
  %1680 = vmatpush1.bf16.msra.mxu0 0
  %1681 = vmatprep.subr.bf16.mxu0 0
  %1682 = vmatpush1.bf16.msra.mxu0 0
  %1683 = vmatprep.subr.bf16.mxu0 0
  %1684 = vmatpush1.bf16.msra.mxu0 0
  %1685 = vmatprep.subr.bf16.mxu0 0
  %1686 = vmatpush1.bf16.msra.mxu0 0
  %1687 = vmatprep.subr.bf16.mxu0 0
  %1688 = vmatpush1.bf16.msra.mxu0 0
  %1689 = vmatprep.subr.bf16.mxu0 0
  %1690 = vmatpush1.bf16.msra.mxu0 0
  %1691 = vmatprep.subr.bf16.mxu0 0
  %1692 = vmatpush1.bf16.msra.mxu0 0
  %1693 = vmatprep.subr.bf16.mxu0 0
  %1694 = vmatpush1.bf16.msra.mxu0 0
  %1695 = vmatprep.subr.bf16.mxu0 0
  %1696 = vmatpush1.bf16.msra.mxu0 0
  %1697 = vmatprep.subr.bf16.mxu0 0
  %1698 = vmatpush1.bf16.msra.mxu0 0
  %1699 = vmatprep.mubr.bf16.mxu0 0
  %1700 = vmatmul.mubr.bf16.gmra.mrb[0].mxu0 %v1640
  %v1701 = vpop.f32.mrb[0].mxu0
  %v1702 = vadd.f32 0.0, %v1701
  %v1703 = vpop.f32.mrb[0].mxu0
  %v1704 = vpop.f32.mrb[0].mxu0
  %v1705 = vadd.f32 0.0, %v1704
  %v1706 = vpop.f32.mrb[0].mxu0
  %1707 = vmatprep.mubr.bf16.mxu0 0
  %1708 = vmatmul.mubr.bf16.gmra.mrb[0].mxu0 %v1643
  %v1709 = vpop.f32.mrb[0].mxu0
  %v1710 = vadd.f32 0.0, %v1709
  %v1711 = vpop.f32.mrb[0].mxu0
  %v1712 = vpop.f32.mrb[0].mxu0
  %v1713 = vadd.f32 0.0, %v1712
  %v1714 = vpop.f32.mrb[0].mxu0
  %1715 = vmatprep.mubr.bf16.mxu0 0
  %1716 = vmatmul.mubr.bf16.gmra.mrb[0].mxu0 %v1646
  %v1717 = vpop.f32.mrb[0].mxu0
  %v1718 = vadd.f32 0.0, %v1717
  %v1719 = vpop.f32.mrb[0].mxu0
  %v1720 = vpop.f32.mrb[0].mxu0
  %v1721 = vadd.f32 0.0, %v1720
  %v1722 = vpop.f32.mrb[0].mxu0
  %1723 = vmatprep.mubr.bf16.mxu0 0
  %1724 = vmatmul.mubr.bf16.gmra.mrb[0].mxu0 %v1649
  %v1725 = vpop.f32.mrb[0].mxu0
  %v1726 = vadd.f32 0.0, %v1725
  %v1727 = vpop.f32.mrb[0].mxu0
  %v1728 = vpop.f32.mrb[0].mxu0
  %v1729 = vadd.f32 0.0, %v1728
  %v1730 = vpop.f32.mrb[0].mxu0
  %1731 = vmatprep.mubr.bf16.mxu0 0
  %1732 = vmatmul.mubr.bf16.gmra.mrb[0].mxu0 %v1652
  %v1733 = vpop.f32.mrb[0].mxu0
  %v1734 = vadd.f32 0.0, %v1733
  %v1735 = vpop.f32.mrb[0].mxu0
  %v1736 = vpop.f32.mrb[0].mxu0
  %v1737 = vadd.f32 0.0, %v1736
  %v1738 = vpop.f32.mrb[0].mxu0
  %1739 = vmatprep.mubr.bf16.mxu0 0
  %1740 = vmatmul.mubr.bf16.gmra.mrb[0].mxu0 %v1655
  %v1741 = vpop.f32.mrb[0].mxu0
  %v1742 = vadd.f32 0.0, %v1741
  %v1743 = vpop.f32.mrb[0].mxu0
  %v1744 = vpop.f32.mrb[0].mxu0
  %v1745 = vadd.f32 0.0, %v1744
  %v1746 = vpop.f32.mrb[0].mxu0
  %1747 = vmatprep.mubr.bf16.mxu0 0
  %1748 = vmatmul.mubr.bf16.gmra.mrb[0].mxu0 %v1658
  %v1749 = vpop.f32.mrb[0].mxu0
  %v1750 = vadd.f32 0.0, %v1749
  %v1751 = vpop.f32.mrb[0].mxu0
  %v1752 = vpop.f32.mrb[0].mxu0
  %v1753 = vadd.f32 0.0, %v1752
  %v1754 = vpop.f32.mrb[0].mxu0
  %1755 = vmatprep.mubr.bf16.mxu0 0
  %1756 = vmatmul.mubr.bf16.gmra.mrb[0].mxu0 %v1661
  %v1757 = vpop.f32.mrb[0].mxu0
  %v1758 = vadd.f32 0.0, %v1757
  %v1759 = vpop.f32.mrb[0].mxu0
  %v1760 = vpop.f32.mrb[0].mxu0
  %v1761 = vadd.f32 0.0, %v1760
  %v1762 = vpop.f32.mrb[0].mxu0
  %1763 = vdwg.mxu0
  %v1764 = vld [vmem:[%s5] sm:$0x1]
  %v1765 = vld [vmem:[%s6] sm:$0x1]
  %v1766 = vsel %vm558, %v1702, 0.0
  %v1767 = vsel %vm558, %v1705, 0.0
  %v1768 = vadd.f32 %v1766, %v1767
  %v1769 = vsel %vm558, %v1710, 0.0
  %v1770 = vadd.f32 %v1768, %v1769
  %v1771 = vsel %vm558, %v1713, 0.0
  %v1772 = vadd.f32 %v1770, %v1771
  %v1773 = vsel %vm558, %v1718, 0.0
  %v1774 = vadd.f32 %v1772, %v1773
  %v1775 = vsel %vm558, %v1721, 0.0
  %v1776 = vadd.f32 %v1774, %v1775
  %v1777 = vsel %vm558, %v1726, 0.0
  %v1778 = vadd.f32 %v1776, %v1777
  %v1779 = vsel %vm558, %v1729, 0.0
  %v1780 = vadd.f32 %v1778, %v1779
  %v1781 = vsel %vm558, %v1734, 0.0
  %v1782 = vadd.f32 %v1780, %v1781
  %v1783 = vsel %vm558, %v1737, 0.0
  %v1784 = vadd.f32 %v1782, %v1783
  %v1785 = vsel %vm558, %v1742, 0.0
  %v1786 = vadd.f32 %v1784, %v1785
  %v1787 = vsel %vm558, %v1745, 0.0
  %v1788 = vadd.f32 %v1786, %v1787
  %v1789 = vsel %vm558, %v1750, 0.0
  %v1790 = vadd.f32 %v1788, %v1789
  %v1791 = vsel %vm558, %v1753, 0.0
  %v1792 = vadd.f32 %v1790, %v1791
  %v1793 = vsel %vm558, %v1758, 0.0
  %v1794 = vadd.f32 %v1792, %v1793
  %v1795 = vsel %vm558, %v1761, 0.0
  %v1796 = vadd.f32 %v1794, %v1795
  %v1797 = vrot.slane %v1796, 4
  %v1798 = vadd.f32 %v1796, %v1797
  %v1799 = vrot.slane %v1798, 2
  %v1800 = vadd.f32 %v1798, %v1799
  %v1801 = vrot.slane %v1800, 1
  %v1802 = vadd.f32 %v1800, %v1801
  %v1803 = vmul.f32 %v1802, %v596
  %v1804 = vsub.f32 %v1702, %v1803
  %v1805 = vsub.f32 %v1705, %v1803
  %v1806 = vsub.f32 %v1710, %v1803
  %v1807 = vsub.f32 %v1713, %v1803
  %v1808 = vsub.f32 %v1718, %v1803
  %v1809 = vsub.f32 %v1721, %v1803
  %v1810 = vsub.f32 %v1726, %v1803
  %v1811 = vsub.f32 %v1729, %v1803
  %v1812 = vsub.f32 %v1734, %v1803
  %v1813 = vsub.f32 %v1737, %v1803
  %v1814 = vsub.f32 %v1742, %v1803
  %v1815 = vsub.f32 %v1745, %v1803
  %v1816 = vsub.f32 %v1750, %v1803
  %v1817 = vsub.f32 %v1753, %v1803
  %v1818 = vsub.f32 %v1758, %v1803
  %v1819 = vsub.f32 %v1761, %v1803
  %v1820 = vmul.f32 %v1804, %v1804
  %v1821 = vmul.f32 %v1805, %v1805
  %v1822 = vmul.f32 %v1806, %v1806
  %v1823 = vmul.f32 %v1807, %v1807
  %v1824 = vmul.f32 %v1808, %v1808
  %v1825 = vmul.f32 %v1809, %v1809
  %v1826 = vmul.f32 %v1810, %v1810
  %v1827 = vmul.f32 %v1811, %v1811
  %v1828 = vmul.f32 %v1812, %v1812
  %v1829 = vmul.f32 %v1813, %v1813
  %v1830 = vmul.f32 %v1814, %v1814
  %v1831 = vmul.f32 %v1815, %v1815
  %v1832 = vmul.f32 %v1816, %v1816
  %v1833 = vmul.f32 %v1817, %v1817
  %v1834 = vmul.f32 %v1818, %v1818
  %v1835 = vmul.f32 %v1819, %v1819
  %v1836 = vsel %vm558, %v1820, 0.0
  %v1837 = vsel %vm558, %v1821, 0.0
  %v1838 = vadd.f32 %v1836, %v1837
  %v1839 = vsel %vm558, %v1822, 0.0
  %v1840 = vadd.f32 %v1838, %v1839
  %v1841 = vsel %vm558, %v1823, 0.0
  %v1842 = vadd.f32 %v1840, %v1841
  %v1843 = vsel %vm558, %v1824, 0.0
  %v1844 = vadd.f32 %v1842, %v1843
  %v1845 = vsel %vm558, %v1825, 0.0
  %v1846 = vadd.f32 %v1844, %v1845
  %v1847 = vsel %vm558, %v1826, 0.0
  %v1848 = vadd.f32 %v1846, %v1847
  %v1849 = vsel %vm558, %v1827, 0.0
  %v1850 = vadd.f32 %v1848, %v1849
  %v1851 = vsel %vm558, %v1828, 0.0
  %v1852 = vadd.f32 %v1850, %v1851
  %v1853 = vsel %vm558, %v1829, 0.0
  %v1854 = vadd.f32 %v1852, %v1853
  %v1855 = vsel %vm558, %v1830, 0.0
  %v1856 = vadd.f32 %v1854, %v1855
  %v1857 = vsel %vm558, %v1831, 0.0
  %v1858 = vadd.f32 %v1856, %v1857
  %v1859 = vsel %vm558, %v1832, 0.0
  %v1860 = vadd.f32 %v1858, %v1859
  %v1861 = vsel %vm558, %v1833, 0.0
  %v1862 = vadd.f32 %v1860, %v1861
  %v1863 = vsel %vm558, %v1834, 0.0
  %v1864 = vadd.f32 %v1862, %v1863
  %v1865 = vsel %vm558, %v1835, 0.0
  %v1866 = vadd.f32 %v1864, %v1865
  %v1867 = vrot.slane %v1866, 4
  %v1868 = vadd.f32 %v1866, %v1867
  %v1869 = vrot.slane %v1868, 2
  %v1870 = vadd.f32 %v1868, %v1869
  %v1871 = vrot.slane %v1870, 1
  %v1872 = vadd.f32 %v1870, %v1871
  %v1873 = vmul.f32 %v1872, %v596
  %v1874 = vadd.f32 %v1873, 1e-05
  %v1875 = vrsqrt.pop %v1874
  %v1876 = vmul.f32 %v1804, %v1875
  %v1877 = vmul.f32 %v1805, %v1875
  %v1878 = vmul.f32 %v1806, %v1875
  %v1879 = vmul.f32 %v1807, %v1875
  %v1880 = vmul.f32 %v1808, %v1875
  %v1881 = vmul.f32 %v1809, %v1875
  %v1882 = vmul.f32 %v1810, %v1875
  %v1883 = vmul.f32 %v1811, %v1875
  %v1884 = vmul.f32 %v1812, %v1875
  %v1885 = vmul.f32 %v1813, %v1875
  %v1886 = vmul.f32 %v1814, %v1875
  %v1887 = vmul.f32 %v1815, %v1875
  %v1888 = vmul.f32 %v1816, %v1875
  %v1889 = vmul.f32 %v1817, %v1875
  %v1890 = vmul.f32 %v1818, %v1875
  %v1891 = vmul.f32 %v1819, %v1875
  %v1893 = vlaneseq
  %v1894 = vshrl.u32 %v1893, 7
  %v1895 = vsub.s32 0, %v1894
  %v1896 = vrot.slane %v1764, %v1895
  %v1898 = vmul.f32 %v1876, %v1896
  %v1899 = vmul.f32 %v1877, %v1896
  %v1900 = vmul.f32 %v1878, %v1896
  %v1901 = vmul.f32 %v1879, %v1896
  %v1902 = vmul.f32 %v1880, %v1896
  %v1903 = vmul.f32 %v1881, %v1896
  %v1904 = vmul.f32 %v1882, %v1896
  %v1905 = vmul.f32 %v1883, %v1896
  %v1906 = vmul.f32 %v1884, %v1896
  %v1907 = vmul.f32 %v1885, %v1896
  %v1908 = vmul.f32 %v1886, %v1896
  %v1909 = vmul.f32 %v1887, %v1896
  %v1910 = vmul.f32 %v1888, %v1896
  %v1911 = vmul.f32 %v1889, %v1896
  %v1912 = vmul.f32 %v1890, %v1896
  %v1913 = vmul.f32 %v1891, %v1896
  %v1915 = vlaneseq
  %v1916 = vshrl.u32 %v1915, 7
  %v1917 = vsub.s32 0, %v1916
  %v1918 = vrot.slane %v1765, %v1917
  %v1920 = vadd.f32 %v1898, %v1918
  %v1921 = vadd.f32 %v1899, %v1918
  %v1922 = vadd.f32 %v1900, %v1918
  %v1923 = vadd.f32 %v1901, %v1918
  %v1924 = vadd.f32 %v1902, %v1918
  %v1925 = vadd.f32 %v1903, %v1918
  %v1926 = vadd.f32 %v1904, %v1918
  %v1927 = vadd.f32 %v1905, %v1918
  %v1928 = vadd.f32 %v1906, %v1918
  %v1929 = vadd.f32 %v1907, %v1918
  %v1930 = vadd.f32 %v1908, %v1918
  %v1931 = vadd.f32 %v1909, %v1918
  %v1932 = vadd.f32 %v1910, %v1918
  %v1933 = vadd.f32 %v1911, %v1918
  %v1934 = vadd.f32 %v1912, %v1918
  %v1935 = vadd.f32 %v1913, %v1918
  %v1936 = vpack.c.bf16 %v74, %v72
  %v1937 = vpack.c.bf16 %v78, %v76
  %v1938 = vpack.c.bf16 %v82, %v80
  %v1939 = vpack.c.bf16 %v86, %v84
  %v1940 = vpack.c.bf16 %v92, %v90
  %v1941 = vpack.c.bf16 %v96, %v94
  %v1942 = vpack.c.bf16 %v100, %v98
  %v1943 = vpack.c.bf16 %v104, %v102
  %v1944 = vld [vmem:[%s7] sm:$0xf]
  %v1945 = vld [vmem:[%s7 + $0x4] sm:$0xf]
  %v1948 = vunpack.c.l.b16 %v1944
  %v1949 = vunpack.c.l.b16 %v1945
  %v1950 = vpack.c.b16 %v1949, %v1948
  %v1953 = vsel %vm343, %v1936, 0
  %v1956 = vsel %vm343, %v1937, 0
  %v1959 = vsel %vm343, %v1938, 0
  %v1962 = vsel %vm343, %v1939, 0
  %v1965 = vsel %vm343, %v1940, 0
  %v1968 = vsel %vm343, %v1941, 0
  %v1971 = vsel %vm343, %v1942, 0
  %v1974 = vsel %vm343, %v1943, 0
  %1976 = vmatprep.subr.bf16.mxu0 0
  %1977 = vmatpush1.bf16.msra.mxu0 %v1950
  %1978 = vmatprep.subr.bf16.mxu0 0
  %1979 = vmatpush1.bf16.msra.mxu0 0
  %1980 = vmatprep.subr.bf16.mxu0 0
  %1981 = vmatpush1.bf16.msra.mxu0 0
  %1982 = vmatprep.subr.bf16.mxu0 0
  %1983 = vmatpush1.bf16.msra.mxu0 0
  %1984 = vmatprep.subr.bf16.mxu0 0
  %1985 = vmatpush1.bf16.msra.mxu0 0
  %1986 = vmatprep.subr.bf16.mxu0 0
  %1987 = vmatpush1.bf16.msra.mxu0 0
  %1988 = vmatprep.subr.bf16.mxu0 0
  %1989 = vmatpush1.bf16.msra.mxu0 0
  %1990 = vmatprep.subr.bf16.mxu0 0
  %1991 = vmatpush1.bf16.msra.mxu0 0
  %1992 = vmatprep.subr.bf16.mxu0 0
  %1993 = vmatpush1.bf16.msra.mxu0 0
  %1994 = vmatprep.subr.bf16.mxu0 0
  %1995 = vmatpush1.bf16.msra.mxu0 0
  %1996 = vmatprep.subr.bf16.mxu0 0
  %1997 = vmatpush1.bf16.msra.mxu0 0
  %1998 = vmatprep.subr.bf16.mxu0 0
  %1999 = vmatpush1.bf16.msra.mxu0 0
  %2000 = vmatprep.subr.bf16.mxu0 0
  %2001 = vmatpush1.bf16.msra.mxu0 0
  %2002 = vmatprep.subr.bf16.mxu0 0
  %2003 = vmatpush1.bf16.msra.mxu0 0
  %2004 = vmatprep.subr.bf16.mxu0 0
  %2005 = vmatpush1.bf16.msra.mxu0 0
  %2006 = vmatprep.subr.bf16.mxu0 0
  %2007 = vmatpush1.bf16.msra.mxu0 0
  %2008 = vmatprep.mubr.bf16.mxu0 0
  %2009 = vmatmul.mubr.bf16.gmra.mrb[0].mxu0 %v1953
  %v2010 = vpop.f32.mrb[0].mxu0
  %v2011 = vadd.f32 0.0, %v2010
  %v2012 = vpop.f32.mrb[0].mxu0
  %v2013 = vpop.f32.mrb[0].mxu0
  %v2014 = vadd.f32 0.0, %v2013
  %v2015 = vpop.f32.mrb[0].mxu0
  %2016 = vmatprep.mubr.bf16.mxu0 0
  %2017 = vmatmul.mubr.bf16.gmra.mrb[0].mxu0 %v1956
  %v2018 = vpop.f32.mrb[0].mxu0
  %v2019 = vadd.f32 0.0, %v2018
  %v2020 = vpop.f32.mrb[0].mxu0
  %v2021 = vpop.f32.mrb[0].mxu0
  %v2022 = vadd.f32 0.0, %v2021
  %v2023 = vpop.f32.mrb[0].mxu0
  %2024 = vmatprep.mubr.bf16.mxu0 0
  %2025 = vmatmul.mubr.bf16.gmra.mrb[0].mxu0 %v1959
  %v2026 = vpop.f32.mrb[0].mxu0
  %v2027 = vadd.f32 0.0, %v2026
  %v2028 = vpop.f32.mrb[0].mxu0
  %v2029 = vpop.f32.mrb[0].mxu0
  %v2030 = vadd.f32 0.0, %v2029
  %v2031 = vpop.f32.mrb[0].mxu0
  %2032 = vmatprep.mubr.bf16.mxu0 0
  %2033 = vmatmul.mubr.bf16.gmra.mrb[0].mxu0 %v1962
  %v2034 = vpop.f32.mrb[0].mxu0
  %v2035 = vadd.f32 0.0, %v2034
  %v2036 = vpop.f32.mrb[0].mxu0
  %v2037 = vpop.f32.mrb[0].mxu0
  %v2038 = vadd.f32 0.0, %v2037
  %v2039 = vpop.f32.mrb[0].mxu0
  %2040 = vmatprep.mubr.bf16.mxu0 0
  %2041 = vmatmul.mubr.bf16.gmra.mrb[0].mxu0 %v1965
  %v2042 = vpop.f32.mrb[0].mxu0
  %v2043 = vadd.f32 0.0, %v2042
  %v2044 = vpop.f32.mrb[0].mxu0
  %v2045 = vpop.f32.mrb[0].mxu0
  %v2046 = vadd.f32 0.0, %v2045
  %v2047 = vpop.f32.mrb[0].mxu0
  %2048 = vmatprep.mubr.bf16.mxu0 0
  %2049 = vmatmul.mubr.bf16.gmra.mrb[0].mxu0 %v1968
  %v2050 = vpop.f32.mrb[0].mxu0
  %v2051 = vadd.f32 0.0, %v2050
  %v2052 = vpop.f32.mrb[0].mxu0
  %v2053 = vpop.f32.mrb[0].mxu0
  %v2054 = vadd.f32 0.0, %v2053
  %v2055 = vpop.f32.mrb[0].mxu0
  %2056 = vmatprep.mubr.bf16.mxu0 0
  %2057 = vmatmul.mubr.bf16.gmra.mrb[0].mxu0 %v1971
  %v2058 = vpop.f32.mrb[0].mxu0
  %v2059 = vadd.f32 0.0, %v2058
  %v2060 = vpop.f32.mrb[0].mxu0
  %v2061 = vpop.f32.mrb[0].mxu0
  %v2062 = vadd.f32 0.0, %v2061
  %v2063 = vpop.f32.mrb[0].mxu0
  %2064 = vmatprep.mubr.bf16.mxu0 0
  %2065 = vmatmul.mubr.bf16.gmra.mrb[0].mxu0 %v1974
  %v2066 = vpop.f32.mrb[0].mxu0
  %v2067 = vadd.f32 0.0, %v2066
  %v2068 = vpop.f32.mrb[0].mxu0
  %v2069 = vpop.f32.mrb[0].mxu0
  %v2070 = vadd.f32 0.0, %v2069
  %v2071 = vpop.f32.mrb[0].mxu0
  %2072 = vdwg.mxu0
  %v2073 = vld [vmem:[%s8] sm:$0x1]
  %v2074 = vld [vmem:[%s9] sm:$0x1]
  %v2075 = vsel %vm558, %v2011, 0.0
  %v2076 = vsel %vm558, %v2014, 0.0
  %v2077 = vadd.f32 %v2075, %v2076
  %v2078 = vsel %vm558, %v2019, 0.0
  %v2079 = vadd.f32 %v2077, %v2078
  %v2080 = vsel %vm558, %v2022, 0.0
  %v2081 = vadd.f32 %v2079, %v2080
  %v2082 = vsel %vm558, %v2027, 0.0
  %v2083 = vadd.f32 %v2081, %v2082
  %v2084 = vsel %vm558, %v2030, 0.0
  %v2085 = vadd.f32 %v2083, %v2084
  %v2086 = vsel %vm558, %v2035, 0.0
  %v2087 = vadd.f32 %v2085, %v2086
  %v2088 = vsel %vm558, %v2038, 0.0
  %v2089 = vadd.f32 %v2087, %v2088
  %v2090 = vsel %vm558, %v2043, 0.0
  %v2091 = vadd.f32 %v2089, %v2090
  %v2092 = vsel %vm558, %v2046, 0.0
  %v2093 = vadd.f32 %v2091, %v2092
  %v2094 = vsel %vm558, %v2051, 0.0
  %v2095 = vadd.f32 %v2093, %v2094
  %v2096 = vsel %vm558, %v2054, 0.0
  %v2097 = vadd.f32 %v2095, %v2096
  %v2098 = vsel %vm558, %v2059, 0.0
  %v2099 = vadd.f32 %v2097, %v2098
  %v2100 = vsel %vm558, %v2062, 0.0
  %v2101 = vadd.f32 %v2099, %v2100
  %v2102 = vsel %vm558, %v2067, 0.0
  %v2103 = vadd.f32 %v2101, %v2102
  %v2104 = vsel %vm558, %v2070, 0.0
  %v2105 = vadd.f32 %v2103, %v2104
  %v2106 = vrot.slane %v2105, 4
  %v2107 = vadd.f32 %v2105, %v2106
  %v2108 = vrot.slane %v2107, 2
  %v2109 = vadd.f32 %v2107, %v2108
  %v2110 = vrot.slane %v2109, 1
  %v2111 = vadd.f32 %v2109, %v2110
  %v2112 = vmul.f32 %v2111, %v596
  %v2113 = vsub.f32 %v2011, %v2112
  %v2114 = vsub.f32 %v2014, %v2112
  %v2115 = vsub.f32 %v2019, %v2112
  %v2116 = vsub.f32 %v2022, %v2112
  %v2117 = vsub.f32 %v2027, %v2112
  %v2118 = vsub.f32 %v2030, %v2112
  %v2119 = vsub.f32 %v2035, %v2112
  %v2120 = vsub.f32 %v2038, %v2112
  %v2121 = vsub.f32 %v2043, %v2112
  %v2122 = vsub.f32 %v2046, %v2112
  %v2123 = vsub.f32 %v2051, %v2112
  %v2124 = vsub.f32 %v2054, %v2112
  %v2125 = vsub.f32 %v2059, %v2112
  %v2126 = vsub.f32 %v2062, %v2112
  %v2127 = vsub.f32 %v2067, %v2112
  %v2128 = vsub.f32 %v2070, %v2112
  %v2129 = vmul.f32 %v2113, %v2113
  %v2130 = vmul.f32 %v2114, %v2114
  %v2131 = vmul.f32 %v2115, %v2115
  %v2132 = vmul.f32 %v2116, %v2116
  %v2133 = vmul.f32 %v2117, %v2117
  %v2134 = vmul.f32 %v2118, %v2118
  %v2135 = vmul.f32 %v2119, %v2119
  %v2136 = vmul.f32 %v2120, %v2120
  %v2137 = vmul.f32 %v2121, %v2121
  %v2138 = vmul.f32 %v2122, %v2122
  %v2139 = vmul.f32 %v2123, %v2123
  %v2140 = vmul.f32 %v2124, %v2124
  %v2141 = vmul.f32 %v2125, %v2125
  %v2142 = vmul.f32 %v2126, %v2126
  %v2143 = vmul.f32 %v2127, %v2127
  %v2144 = vmul.f32 %v2128, %v2128
  %v2145 = vsel %vm558, %v2129, 0.0
  %v2146 = vsel %vm558, %v2130, 0.0
  %v2147 = vadd.f32 %v2145, %v2146
  %v2148 = vsel %vm558, %v2131, 0.0
  %v2149 = vadd.f32 %v2147, %v2148
  %v2150 = vsel %vm558, %v2132, 0.0
  %v2151 = vadd.f32 %v2149, %v2150
  %v2152 = vsel %vm558, %v2133, 0.0
  %v2153 = vadd.f32 %v2151, %v2152
  %v2154 = vsel %vm558, %v2134, 0.0
  %v2155 = vadd.f32 %v2153, %v2154
  %v2156 = vsel %vm558, %v2135, 0.0
  %v2157 = vadd.f32 %v2155, %v2156
  %v2158 = vsel %vm558, %v2136, 0.0
  %v2159 = vadd.f32 %v2157, %v2158
  %v2160 = vsel %vm558, %v2137, 0.0
  %v2161 = vadd.f32 %v2159, %v2160
  %v2162 = vsel %vm558, %v2138, 0.0
  %v2163 = vadd.f32 %v2161, %v2162
  %v2164 = vsel %vm558, %v2139, 0.0
  %v2165 = vadd.f32 %v2163, %v2164
  %v2166 = vsel %vm558, %v2140, 0.0
  %v2167 = vadd.f32 %v2165, %v2166
  %v2168 = vsel %vm558, %v2141, 0.0
  %v2169 = vadd.f32 %v2167, %v2168
  %v2170 = vsel %vm558, %v2142, 0.0
  %v2171 = vadd.f32 %v2169, %v2170
  %v2172 = vsel %vm558, %v2143, 0.0
  %v2173 = vadd.f32 %v2171, %v2172
  %v2174 = vsel %vm558, %v2144, 0.0
  %v2175 = vadd.f32 %v2173, %v2174
  %v2176 = vrot.slane %v2175, 4
  %v2177 = vadd.f32 %v2175, %v2176
  %v2178 = vrot.slane %v2177, 2
  %v2179 = vadd.f32 %v2177, %v2178
  %v2180 = vrot.slane %v2179, 1
  %v2181 = vadd.f32 %v2179, %v2180
  %v2182 = vmul.f32 %v2181, %v596
  %v2183 = vadd.f32 %v2182, 1e-05
  %v2184 = vrsqrt.pop %v2183
  %v2185 = vmul.f32 %v2113, %v2184
  %v2186 = vmul.f32 %v2114, %v2184
  %v2187 = vmul.f32 %v2115, %v2184
  %v2188 = vmul.f32 %v2116, %v2184
  %v2189 = vmul.f32 %v2117, %v2184
  %v2190 = vmul.f32 %v2118, %v2184
  %v2191 = vmul.f32 %v2119, %v2184
  %v2192 = vmul.f32 %v2120, %v2184
  %v2193 = vmul.f32 %v2121, %v2184
  %v2194 = vmul.f32 %v2122, %v2184
  %v2195 = vmul.f32 %v2123, %v2184
  %v2196 = vmul.f32 %v2124, %v2184
  %v2197 = vmul.f32 %v2125, %v2184
  %v2198 = vmul.f32 %v2126, %v2184
  %v2199 = vmul.f32 %v2127, %v2184
  %v2200 = vmul.f32 %v2128, %v2184
  %v2202 = vlaneseq
  %v2203 = vshrl.u32 %v2202, 7
  %v2204 = vsub.s32 0, %v2203
  %v2205 = vrot.slane %v2073, %v2204
  %v2207 = vmul.f32 %v2185, %v2205
  %v2208 = vmul.f32 %v2186, %v2205
  %v2209 = vmul.f32 %v2187, %v2205
  %v2210 = vmul.f32 %v2188, %v2205
  %v2211 = vmul.f32 %v2189, %v2205
  %v2212 = vmul.f32 %v2190, %v2205
  %v2213 = vmul.f32 %v2191, %v2205
  %v2214 = vmul.f32 %v2192, %v2205
  %v2215 = vmul.f32 %v2193, %v2205
  %v2216 = vmul.f32 %v2194, %v2205
  %v2217 = vmul.f32 %v2195, %v2205
  %v2218 = vmul.f32 %v2196, %v2205
  %v2219 = vmul.f32 %v2197, %v2205
  %v2220 = vmul.f32 %v2198, %v2205
  %v2221 = vmul.f32 %v2199, %v2205
  %v2222 = vmul.f32 %v2200, %v2205
  %v2224 = vlaneseq
  %v2225 = vshrl.u32 %v2224, 7
  %v2226 = vsub.s32 0, %v2225
  %v2227 = vrot.slane %v2074, %v2226
  %v2229 = vadd.f32 %v2207, %v2227
  %v2230 = vadd.f32 %v2208, %v2227
  %v2231 = vadd.f32 %v2209, %v2227
  %v2232 = vadd.f32 %v2210, %v2227
  %v2233 = vadd.f32 %v2211, %v2227
  %v2234 = vadd.f32 %v2212, %v2227
  %v2235 = vadd.f32 %v2213, %v2227
  %v2236 = vadd.f32 %v2214, %v2227
  %v2237 = vadd.f32 %v2215, %v2227
  %v2238 = vadd.f32 %v2216, %v2227
  %v2239 = vadd.f32 %v2217, %v2227
  %v2240 = vadd.f32 %v2218, %v2227
  %v2241 = vadd.f32 %v2219, %v2227
  %v2242 = vadd.f32 %v2220, %v2227
  %v2243 = vadd.f32 %v2221, %v2227
  %v2244 = vadd.f32 %v2222, %v2227
  %v2245 = vadd.f32 %v1920, %v2229
  %v2246 = vadd.f32 %v1921, %v2230
  %v2247 = vadd.f32 %v1922, %v2231
  %v2248 = vadd.f32 %v1923, %v2232
  %v2249 = vadd.f32 %v1924, %v2233
  %v2250 = vadd.f32 %v1925, %v2234
  %v2251 = vadd.f32 %v1926, %v2235
  %v2252 = vadd.f32 %v1927, %v2236
  %v2253 = vadd.f32 %v1928, %v2237
  %v2254 = vadd.f32 %v1929, %v2238
  %v2255 = vadd.f32 %v1930, %v2239
  %v2256 = vadd.f32 %v1931, %v2240
  %v2257 = vadd.f32 %v1932, %v2241
  %v2258 = vadd.f32 %v1933, %v2242
  %v2259 = vadd.f32 %v1934, %v2243
  %v2260 = vadd.f32 %v1935, %v2244
  %v2261 = vmax.f32 %v2245, 0.0
  %v2262 = vmax.f32 %v2246, 0.0
  %v2263 = vmax.f32 %v2247, 0.0
  %v2264 = vmax.f32 %v2248, 0.0
  %v2265 = vmax.f32 %v2249, 0.0
  %v2266 = vmax.f32 %v2250, 0.0
  %v2267 = vmax.f32 %v2251, 0.0
  %v2268 = vmax.f32 %v2252, 0.0
  %v2269 = vmax.f32 %v2253, 0.0
  %v2270 = vmax.f32 %v2254, 0.0
  %v2271 = vmax.f32 %v2255, 0.0
  %v2272 = vmax.f32 %v2256, 0.0
  %v2273 = vmax.f32 %v2257, 0.0
  %v2274 = vmax.f32 %v2258, 0.0
  %v2275 = vmax.f32 %v2259, 0.0
  %v2276 = vmax.f32 %v2260, 0.0
  %2277 = vst.msk [vmem:[%s10] sm:$0xff] %vm558, %v2261
  %2278 = vst.msk [vmem:[%s10 + $0x8] sm:$0xff] %vm558, %v2262
  %2279 = vst.msk [vmem:[%s10 + $0x10] sm:$0xff] %vm558, %v2263
  %2280 = vst.msk [vmem:[%s10 + $0x18] sm:$0xff] %vm558, %v2264
  %2281 = vst.msk [vmem:[%s10 + $0x20] sm:$0xff] %vm558, %v2265
  %2282 = vst.msk [vmem:[%s10 + $0x28] sm:$0xff] %vm558, %v2266
  %2283 = vst.msk [vmem:[%s10 + $0x30] sm:$0xff] %vm558, %v2267
  %2284 = vst.msk [vmem:[%s10 + $0x38] sm:$0xff] %vm558, %v2268
  %2285 = vst.msk [vmem:[%s10 + $0x40] sm:$0xff] %vm558, %v2269
  %2286 = vst.msk [vmem:[%s10 + $0x48] sm:$0xff] %vm558, %v2270
  %2287 = vst.msk [vmem:[%s10 + $0x50] sm:$0xff] %vm558, %v2271
  %2288 = vst.msk [vmem:[%s10 + $0x58] sm:$0xff] %vm558, %v2272
  %2289 = vst.msk [vmem:[%s10 + $0x60] sm:$0xff] %vm558, %v2273
  %2290 = vst.msk [vmem:[%s10 + $0x68] sm:$0xff] %vm558, %v2274
  %2291 = vst.msk [vmem:[%s10 + $0x70] sm:$0xff] %vm558, %v2275
  %2292 = vst.msk [vmem:[%s10 + $0x78] sm:$0xff] %vm558, %v2276
  // Predicated region
  $region42: #{tpu_custom_call.1} parent=0 // pred_check
    _
  $region43: #{tpu_custom_call.1} parent=0 // pred_check_branch
    %2294 = sbr.rel (0) target = $region45
  $region44: #{tpu_custom_call.1} parent=0 // pred_region
    _
  $region45: #{tpu_custom_call.1} parent=0 // pred_fallthru
    _
  // Predicated region
  $region46: #{tpu_custom_call.1} parent=0 // pred_check
    _
  $region47: #{tpu_custom_call.1} parent=0 // pred_check_branch
    %2296 = sbr.rel (0) target = $region49
  $region48: #{tpu_custom_call.1} parent=0 // pred_region
    _
  $region49: #{tpu_custom_call.1} parent=0 // pred_fallthru
    _

</llo_original>
